<compile_context>
chip_gen: v5e
topology: v5e:2x2
jax: 0.10.0
libtpu: 0.0.40
codegen_flags: <defaults>
</compile_context>

<pallas_src>
import functools

import jax
import jax.numpy as jnp
from jax import lax
from jax.experimental import pallas as pl
from jax.experimental.pallas import tpu as pltpu


def _round_up(x, m):
    return (x + m - 1) // m * m


def _block_toeplitz_weight(weight, Wo, s, Lin, Lout):
    """(O, C, kd, kh, kw) -> (kd*kh*Lin, Lout) matrix that folds the kw and C
    contractions (and the output-x stride) into a lane->lane matmul per
    (dz, dy) tap."""
    O, C, kd, kh, kw = weight.shape
    wt = jnp.transpose(weight, (2, 3, 4, 1, 0)).astype(jnp.float32)  # (kd,kh,kw,C,O)
    xo = jnp.arange(Wo)
    in_lane = ((xo[:, None, None] * s + jnp.arange(kw)[None, :, None]) * C
               + jnp.arange(C)[None, None, :])                        # (Wo,kw,C)
    out_lane = xo[:, None] * O + jnp.arange(O)[None, :]               # (Wo,O)
    ii = jnp.broadcast_to(in_lane[:, :, :, None], (Wo, kw, C, O))
    oo = jnp.broadcast_to(out_lane[:, None, None, :], (Wo, kw, C, O))
    blocks = []
    for dz in range(kd):
        for dy in range(kh):
            vals = jnp.broadcast_to(wt[dz, dy][None], (Wo, kw, C, O))
            blocks.append(
                jnp.zeros((Lin, Lout), jnp.float32).at[ii, oo].set(vals))
    return jnp.concatenate(blocks, axis=0)                            # (taps*Lin, Lout)


def _conv_bn_relu_kernel(a_ref, h_ref, w_ref, scale_ref, shift_ref, o_ref, *,
                         row_offsets, tm):
    # a_ref: (tm, Lin) bf16    -- main (n,z,y) anchor-row tile
    # h_ref: (halo, Lin) bf16  -- halo rows immediately following the tile
    # w_ref: (taps*Lin, Lout) bf16  -- block-Toeplitz weight (resident)
    # scale_ref / shift_ref: (1, Lout) f32;  o_ref: (tm, Lout) bf16
    slab = jnp.concatenate(
        [a_ref[...].astype(jnp.float32), h_ref[...].astype(jnp.float32)],
        axis=0)                                           # (tm+halo, Lin) f32
    # On-chip im2col along K: 9 statically shifted row slices, lane-aligned
    # concat at Lin(=128k) boundaries.  Single deep-K bf16 matmul follows.
    kmat = jnp.concatenate(
        [slab[off:off + tm, :].astype(jnp.bfloat16) for off in row_offsets],
        axis=1)                                           # (tm, taps*Lin) bf16
    acc = jnp.dot(kmat, w_ref[...], preferred_element_type=jnp.float32)
    y = acc * scale_ref[...] + shift_ref[...]             # fused bias + BN
    o_ref[...] = jnp.maximum(y, 0.0).astype(o_ref.dtype)  # ReLU, bf16 store


def conv3d_bn_relu(x, weight, bias, gamma=None, beta=None, run_mean=None,
                   run_var=None, *, stride, padding, eps=1e-5, tm_target=512):
    N, C, D, H, W = x.shape
    O, _, kd, kh, kw = weight.shape
    s, p = stride, padding
    Do = (D + 2 * p - kd) // s + 1
    Ho = (H + 2 * p - kh) // s + 1
    Wo = (W + 2 * p - kw) // s + 1
    Dp, Hp, Wp = D + 2 * p, H + 2 * p, W + 2 * p

    Lin = _round_up(Wp * C, 128)        # lane-dense input rows
    Lout = _round_up(Wo * O, 128)       # lane-dense output rows
    taps = kd * kh

    # ---- activations: NCDHW -> bf16 rows of (n, z, y) with (x, c) on lanes.
    xr = jnp.transpose(x, (0, 2, 3, 4, 1))                        # NDHWC
    xr = jnp.pad(xr, ((0, 0), (p, p), (p, p), (p, p), (0, 0)))
    R = N * Dp * Hp
    xr = xr.reshape(R, Wp * C)
    xr = jnp.pad(xr, ((0, 0), (0, Lin - Wp * C))).astype(jnp.bfloat16)

    # ---- static per-tap row offsets (dz, dy) and halo sizing.
    row_offsets = tuple(dz * Hp + dy for dz in range(kd) for dy in range(kh))
    max_off = row_offsets[-1]
    halo = _round_up(max(max_off, 1), 16)     # 16: bf16 sublane packing

    # Row tile: aim for tm_target, keep >=2 grid steps when possible (v7x
    # megacore), and make tm a multiple of the halo block so the halo
    # BlockSpec index map stays exact.
    tm = min(tm_target, _round_up(pl.cdiv(R, 2), 16))
    tm = _round_up(max(tm, halo), halo)
    halo_mul = tm // halo
    n_tiles = pl.cdiv(R, tm)
    R_pad = n_tiles * tm + halo               # extra zero rows feed last halo
    xr = jnp.pad(xr, ((0, R_pad - R), (0, 0)))

    # ---- block-Toeplitz weight, bf16.
    wbig = _block_toeplitz_weight(weight, Wo, s, Lin, Lout).astype(jnp.bfloat16)

    # ---- conv bias + inference BatchNorm as per-lane scale/shift.
    if gamma is None:                          # batch_norm=False path
        scale_c = jnp.ones((O,), jnp.float32)
        shift_c = bias.astype(jnp.float32)
    else:
        scale_c = gamma / jnp.sqrt(run_var + eps)
        shift_c = (bias - run_mean) * scale_c + beta
    scale = jnp.pad(jnp.tile(scale_c, Wo), (0, Lout - Wo * O))
    shift = jnp.pad(jnp.tile(shift_c, Wo), (0, Lout - Wo * O))
    scale = scale.reshape(1, Lout).astype(jnp.float32)
    shift = shift.reshape(1, Lout).astype(jnp.float32)

    kernel = functools.partial(_conv_bn_relu_kernel,
                               row_offsets=row_offsets, tm=tm)

    out = pl.pallas_call(
        kernel,
        out_shape=jax.ShapeDtypeStruct((n_tiles * tm, Lout), jnp.bfloat16),
        grid_spec=pltpu.PrefetchScalarGridSpec(
            num_scalar_prefetch=0,
            grid=(n_tiles,),
            in_specs=[
                pl.BlockSpec((tm, Lin), lambda i: (i, 0)),               # rows
                pl.BlockSpec((halo, Lin),
                             lambda i: ((i + 1) * halo_mul, 0)),         # halo
                pl.BlockSpec((taps * Lin, Lout), lambda i: (0, 0)),      # weight
                pl.BlockSpec((1, Lout), lambda i: (0, 0)),               # scale
                pl.BlockSpec((1, Lout), lambda i: (0, 0)),               # shift
            ],
            out_specs=pl.BlockSpec((tm, Lout), lambda i: (i, 0)),
        ),
        compiler_params=pltpu.CompilerParams(
            dimension_semantics=("parallel",)),
    )(xr, xr, wbig, scale, shift)

    # Keep only valid (z, y) anchors (stride over padded coords; boundary rows
    # that read "wrapped" neighbours are discarded here) and valid (x, o) lanes.
    y = out[:R].reshape(N, Dp, Hp, Lout)
    y = y[:, :(Do - 1) * s + 1:s, :(Ho - 1) * s + 1:s, :Wo * O]
    y = y.reshape(N, Do, Ho, Wo, O)
    # TODO(synk): in production keep bf16 NDHWC across layers; convert back to
    #             f32 NCDHW here only to match the PyTorch module boundary.
    return jnp.transpose(y, (0, 4, 1, 2, 3)).astype(jnp.float32)


def _reference(x, weight, bias, gamma, beta, run_mean, run_var, s, p, eps=1e-5):
    # Same bf16 rounding of activations/weights as the kernel, f32 accumulation.
    O = weight.shape[0]
    xr = x.astype(jnp.bfloat16).astype(jnp.float32)
    wr = weight.astype(jnp.bfloat16).astype(jnp.float32)
    y = lax.conv_general_dilated(
        xr, wr, window_strides=(s, s, s), padding=[(p, p)] * 3,
        dimension_numbers=("NCDHW", "OIDHW", "NCDHW"),
        precision=lax.Precision.HIGHEST,
        preferred_element_type=jnp.float32)
    y = y + bias.reshape(1, O, 1, 1, 1)
    y = (y - run_mean.reshape(1, O, 1, 1, 1)) / jnp.sqrt(
        run_var.reshape(1, O, 1, 1, 1) + eps)
    y = y * gamma.reshape(1, O, 1, 1, 1) + beta.reshape(1, O, 1, 1, 1)
    return jnp.maximum(y, 0.0)


if __name__ == "__main__":
    # Small shapes consistent with Conv3d(in_channels=4, out_channels=8, k=3, s=1, p=1)
    N, C, D, H, W = 2, 4, 8, 8, 8
    O, k, s, p = 8, 3, 1, 1

    key = jax.random.PRNGKey(0)
    kx, kw_, kb, kg, kbt, km, kv = jax.random.split(key, 7)

    x = jax.random.normal(kx, (N, C, D, H, W), jnp.float32)
    weight = 0.1 * jax.random.normal(kw_, (O, C, k, k, k), jnp.float32)
    bias = 0.1 * jax.random.normal(kb, (O,), jnp.float32)
    gamma = 1.0 + 0.1 * jax.random.normal(kg, (O,), jnp.float32)
    beta = 0.1 * jax.random.normal(kbt, (O,), jnp.float32)
    run_mean = 0.1 * jax.random.normal(km, (O,), jnp.float32)
    run_var = 1.0 + 0.1 * jax.nn.softplus(jax.random.normal(kv, (O,), jnp.float32))

    out = conv3d_bn_relu(x, weight, bias, gamma, beta, run_mean, run_var,
                         stride=s, padding=p)
    out = jax.block_until_ready(out)

    ref = _reference(x, weight, bias, gamma, beta, run_mean, run_var, s, p)
    assert out.shape == ref.shape == (N, O, D, H, W)
    # Kernel stores bf16 (review: halve writeback), so allow ~1 bf16 ulp.
    assert jnp.allclose(out, ref, rtol=2e-2, atol=2e-2), (
        float(jnp.max(jnp.abs(out - ref))))

    print("KERNEL_OK")
</pallas_src>

<mosaic_0001>
module attributes {stable_mosaic.version = 11 : i64} {
  func.func @_conv_bn_relu_kernel(%arg0: i32, %arg1: memref<128x128xbf16, #tpu.memory_space<vmem>>, %arg2: memref<32x128xbf16, #tpu.memory_space<vmem>>, %arg3: memref<1152x128xbf16, #tpu.memory_space<vmem>>, %arg4: memref<1x128xf32, #tpu.memory_space<vmem>>, %arg5: memref<1x128xf32, #tpu.memory_space<vmem>>, %arg6: memref<128x128xbf16, #tpu.memory_space<vmem>>) attributes {dimension_semantics = [#tpu.dimension_semantics<parallel>], iteration_bounds = array<i64: 2>, scalar_prefetch = 0 : i64, scratch_operands = 0 : i64, tpu.core_type = #tpu.core_type<tc>, window_params = [{transform_indices = @transform_0, window_bounds = array<i64: 128, 128>}, {transform_indices = @transform_1, window_bounds = array<i64: 32, 128>}, {pipeline_mode = #tpu.pipeline_mode<synchronous>, transform_indices = @transform_2, window_bounds = array<i64: 1152, 128>}, {pipeline_mode = #tpu.pipeline_mode<synchronous>, transform_indices = @transform_3, window_bounds = array<i64: 1, 128>}, {pipeline_mode = #tpu.pipeline_mode<synchronous>, transform_indices = @transform_4, window_bounds = array<i64: 1, 128>}, {transform_indices = @transform_5, window_bounds = array<i64: 128, 128>}]} {
    %c0 = arith.constant 0 : index
    %c0_0 = arith.constant 0 : index
    %0 = vector.load %arg1[%c0, %c0_0] : memref<128x128xbf16, #tpu.memory_space<vmem>>, vector<128x128xbf16>
    %1 = arith.extf %0 : vector<128x128xbf16> to vector<128x128xf32>
    %c0_1 = arith.constant 0 : index
    %c0_2 = arith.constant 0 : index
    %2 = vector.load %arg2[%c0_1, %c0_2] : memref<32x128xbf16, #tpu.memory_space<vmem>>, vector<32x128xbf16>
    %3 = arith.extf %2 : vector<32x128xbf16> to vector<32x128xf32>
    %4 = tpu.concatenate %1, %3 in 0 : vector<128x128xf32>, vector<32x128xf32> -> vector<160x128xf32>
    %5 = vector.extract_strided_slice %4 {offsets = [0, 0], sizes = [128, 128], strides = [1, 1]} : vector<160x128xf32> to vector<128x128xf32>
    %6 = arith.truncf %5 : vector<128x128xf32> to vector<128x128xbf16>
    %7 = vector.extract_strided_slice %4 {offsets = [1, 0], sizes = [128, 128], strides = [1, 1]} : vector<160x128xf32> to vector<128x128xf32>
    %8 = arith.truncf %7 : vector<128x128xf32> to vector<128x128xbf16>
    %9 = vector.extract_strided_slice %4 {offsets = [2, 0], sizes = [128, 128], strides = [1, 1]} : vector<160x128xf32> to vector<128x128xf32>
    %10 = arith.truncf %9 : vector<128x128xf32> to vector<128x128xbf16>
    %11 = vector.extract_strided_slice %4 {offsets = [10, 0], sizes = [128, 128], strides = [1, 1]} : vector<160x128xf32> to vector<128x128xf32>
    %12 = arith.truncf %11 : vector<128x128xf32> to vector<128x128xbf16>
    %13 = vector.extract_strided_slice %4 {offsets = [11, 0], sizes = [128, 128], strides = [1, 1]} : vector<160x128xf32> to vector<128x128xf32>
    %14 = arith.truncf %13 : vector<128x128xf32> to vector<128x128xbf16>
    %15 = vector.extract_strided_slice %4 {offsets = [12, 0], sizes = [128, 128], strides = [1, 1]} : vector<160x128xf32> to vector<128x128xf32>
    %16 = arith.truncf %15 : vector<128x128xf32> to vector<128x128xbf16>
    %17 = vector.extract_strided_slice %4 {offsets = [20, 0], sizes = [128, 128], strides = [1, 1]} : vector<160x128xf32> to vector<128x128xf32>
    %18 = arith.truncf %17 : vector<128x128xf32> to vector<128x128xbf16>
    %19 = vector.extract_strided_slice %4 {offsets = [21, 0], sizes = [128, 128], strides = [1, 1]} : vector<160x128xf32> to vector<128x128xf32>
    %20 = arith.truncf %19 : vector<128x128xf32> to vector<128x128xbf16>
    %21 = vector.extract_strided_slice %4 {offsets = [22, 0], sizes = [128, 128], strides = [1, 1]} : vector<160x128xf32> to vector<128x128xf32>
    %22 = arith.truncf %21 : vector<128x128xf32> to vector<128x128xbf16>
    %23 = tpu.concatenate %6, %8, %10, %12, %14, %16, %18, %20, %22 in 1 : vector<128x128xbf16>, vector<128x128xbf16>, vector<128x128xbf16>, vector<128x128xbf16>, vector<128x128xbf16>, vector<128x128xbf16>, vector<128x128xbf16>, vector<128x128xbf16>, vector<128x128xbf16> -> vector<128x1152xbf16>
    %c0_3 = arith.constant 0 : index
    %c0_4 = arith.constant 0 : index
    %24 = vector.load %arg3[%c0_3, %c0_4] : memref<1152x128xbf16, #tpu.memory_space<vmem>>, vector<1152x128xbf16>
    %cst = arith.constant dense<0.000000e+00> : vector<128x128xf32>
    %25 = tpu.matmul %23, %24, %cst {dimension_numbers = #tpu.dot_dimension_numbers<[1], [0], [0], [1], [0, 0, 1, 1], [], []>} : vector<128x1152xbf16>, vector<1152x128xbf16>, vector<128x128xf32> -> vector<128x128xf32>
    %c0_5 = arith.constant 0 : index
    %c0_6 = arith.constant 0 : index
    %26 = vector.load %arg4[%c0_5, %c0_6] : memref<1x128xf32, #tpu.memory_space<vmem>>, vector<1x128xf32>
    %27 = vector.broadcast %26 : vector<1x128xf32> to vector<128x128xf32>
    %28 = arith.mulf %25, %27 : vector<128x128xf32>
    %c0_7 = arith.constant 0 : index
    %c0_8 = arith.constant 0 : index
    %29 = vector.load %arg5[%c0_7, %c0_8] : memref<1x128xf32, #tpu.memory_space<vmem>>, vector<1x128xf32>
    %30 = vector.broadcast %29 : vector<1x128xf32> to vector<128x128xf32>
    %31 = arith.addf %28, %30 : vector<128x128xf32>
    %cst_9 = arith.constant 0.000000e+00 : f32
    %32 = vector.broadcast %cst_9 : f32 to vector<128x128xf32>
    %33 = arith.maximumf %31, %32 : vector<128x128xf32>
    %34 = arith.truncf %33 : vector<128x128xf32> to vector<128x128xbf16>
    %c0_10 = arith.constant 0 : index
    %c0_11 = arith.constant 0 : index
    %35 = vector.load %arg6[%c0_10, %c0_11] : memref<128x128xbf16, #tpu.memory_space<vmem>>, vector<128x128xbf16>
    tpu.vector_store %arg6[%c0_10, %c0_11], %34 {strides = array<i32>} : memref<128x128xbf16, #tpu.memory_space<vmem>>, vector<128x128xbf16>,
    return
  }
  func.func @transform_0(%arg0: i32) -> (i32, i32) {
    %c0_i32 = arith.constant 0 : i32
    %c0_i32_0 = arith.constant 0 : i32
    return %arg0, %c0_i32 : i32, i32
  }
  func.func @transform_1(%arg0: i32) -> (i32, i32) {
    %c1_i32 = arith.constant 1 : i32
    %0 = arith.addi %arg0, %c1_i32 : i32
    %c4_i32 = arith.constant 4 : i32
    %1 = arith.muli %0, %c4_i32 : i32
    %c0_i32 = arith.constant 0 : i32
    %c0_i32_0 = arith.constant 0 : i32
    return %1, %c0_i32 : i32, i32
  }
  func.func @transform_2(%arg0: i32) -> (i32, i32) {
    %c0_i32 = arith.constant 0 : i32
    %c0_i32_0 = arith.constant 0 : i32
    %c0_i32_1 = arith.constant 0 : i32
    return %c0_i32, %c0_i32_0 : i32, i32
  }
  func.func @transform_3(%arg0: i32) -> (i32, i32) {
    %c0_i32 = arith.constant 0 : i32
    %c0_i32_0 = arith.constant 0 : i32
    %c0_i32_1 = arith.constant 0 : i32
    return %c0_i32, %c0_i32_0 : i32, i32
  }
  func.func @transform_4(%arg0: i32) -> (i32, i32) {
    %c0_i32 = arith.constant 0 : i32
    %c0_i32_0 = arith.constant 0 : i32
    %c0_i32_1 = arith.constant 0 : i32
    return %c0_i32, %c0_i32_0 : i32, i32
  }
  func.func @transform_5(%arg0: i32) -> (i32, i32) {
    %c0_i32 = arith.constant 0 : i32
    %c0_i32_0 = arith.constant 0 : i32
    return %arg0, %c0_i32 : i32, i32
  }
}

</mosaic_0001>

<llo_original>
// kernel: tpu_custom_call.1
$region0: #{tpu_custom_call.1}
  #allocation0 [shape = 'u32[]', space=smem, size = 0x4, offset = 0x4, fixed_abs, tag = 'smem constant byte address 0x4 - core index']
  #allocation1 [shape = 'u32[72,128]{1,0:T(1,128)}', space=vmem, size = 0x9000, scoped, tag = 'internal scratch']
  %s0 = inlined_call_operand.hbm [shape: bf16[288,128], index: 0, kind: input, shape index: {}]
  %s1 = inlined_call_operand.hbm [shape: bf16[288,128], index: 1, kind: input, shape index: {}]
  %s2 = inlined_call_operand.hbm [shape: bf16[1152,128], index: 2, kind: input, shape index: {}]
  %s3 = inlined_call_operand.vmem [shape: f32[1,128], index: 3, kind: input, shape index: {}]
  %s4 = inlined_call_operand.vmem [shape: f32[1,128], index: 4, kind: input, shape index: {}]
  %s5 = inlined_call_operand.hbm [shape: bf16[256,128], index: 5, kind: output, shape index: {}]
  %s6 = sld [smem:[#allocation0]]
  $region65: #{tpu_custom_call.1} parent=0
    _
  %s8 = ssub.s32 1, %s6
  %s9 = scalar_select 0, %s8, %s6
  $region1: #{tpu_custom_call.1} parent=0
    #allocation2 [shape = 'u8[65536]{0}', space=vmem, size = 0x10000, scoped, tag = 'input window, operand 0']
    #allocation3 [shape = 's32[2]{0}', space=sflag, size = 0x8, scoped, tag = 'scoped memory for tpu_custom_call.1']
    #allocation4 [shape = 's32[2]{0}', space=sflag, size = 0x8, scoped, tag = 'scoped memory for tpu_custom_call.1']
    #allocation5 [shape = 'u8[16384]{0}', space=vmem, size = 0x4000, scoped, tag = 'input window, operand 1']
    #allocation6 [shape = 's32[2]{0}', space=sflag, size = 0x8, scoped, tag = 'scoped memory for tpu_custom_call.1']
    #allocation7 [shape = 'u8[294912]{0}', space=vmem, size = 0x48000, scoped, tag = 'input window, operand 2, single buffered']
    #allocation8 [shape = 'u8[65536]{0}', space=vmem, size = 0x10000, scoped, tag = 'output window, operand 0']
    %10 = vsyncpa [#allocation3], 0
    %s11 = scalar_lea.sflag [#allocation3], 1
    %12 = vsyncpa %s11, 0
    %13 = vsyncpa [#allocation6], 0
    %s14 = scalar_lea.sflag [#allocation6], 1
    %15 = vsyncpa %s14, 0
    %16 = vsyncpa [#allocation4], 0
    %s17 = scalar_lea.sflag [#allocation4], 1
    %18 = vsyncpa %s17, 0
    loop: start=0, step=1, limit=4
    $region2: #{tpu_custom_call.1} parent=1 // loop_pre_header
      _
    $region3: #{tpu_custom_call.1} parent=1 // loop_header
      %s20 = sphi 0, %s24
      %p21 = scmp.ge.s32.totalorder %s20, 4
      %s30 = sphi 0, %s32
      %s33 = sphi 0, %s30
      %s34 = sphi 0, %s33
      %s50 = sphi 0, %s34
      %s60 = sphi 0, %s62
      %s63 = sphi 0, %s60
      %s64 = sphi 0, %s63
      %s80 = sphi 0, %s64
      %s84 = sphi 0, %s84
      %s86 = sphi 0, %s84
      %s87 = sphi 0, %s86
      %s101 = sphi 0, %s87
      %s105 = sphi 0, %s105
      %s107 = sphi 0, %s105
      %s108 = sphi 0, %s107
      %s122 = sphi 0, %s108
      %s126 = sphi 0, %s126
      %s128 = sphi 0, %s126
      %s129 = sphi 0, %s128
      %s143 = sphi 0, %s129
      %s149 = sphi 0, %s151
      %s152 = sphi 0, %s149
      %s153 = sphi 0, %s152
      %s169 = sphi 0, %s153
    $region4: #{tpu_custom_call.1} parent=1 // loop_header_branch
      %23 = sbr.rel (%p21) target = $region8
    $region5: #{tpu_custom_call.1} parent=1 // loop_body
      %s25 = ssub.s32 %s20, 1
      %s26 = ssub.s32 %s20, 2
      %s27 = sadd.s32 %s20, 1
      %s28 = ssub.s32 %s20, %s27
      %p29 = scmp.eq.s32.totalorder %s28, 0
      %s31 = sadd.s32 %s30, 1
      %s32 = scalar_select %p29, %s30, %s31
      %p35 = pneg %p29
      %p36 = scmp.eq.s32.totalorder %s20, 1
      %p37 = por %p35, %p36
      %p38 = scmp.ne.s32.totalorder %s30, %s33
      %p39 = scmp.eq.s32.totalorder %s20, 0
      %p40 = por %p38, %p39
      %p41 = scmp.ne.s32.totalorder %s30, %s33
      %p42 = scmp.eq.s32.totalorder %s25, 1
      %p43 = por %p41, %p42
      %p44 = scmp.ne.s32.totalorder %s33, %s34
      %p45 = scmp.eq.s32.totalorder %s25, 0
      %p46 = por %p44, %p45
      %p47 = scmp.ne.s32.totalorder %s33, %s34
      %p48 = scmp.eq.s32.totalorder %s26, 1
      %p49 = por %p47, %p48
      %p51 = scmp.ne.s32.totalorder %s34, %s50
      %p52 = scmp.eq.s32.totalorder %s26, 0
      %p53 = por %p51, %p52
      %s54 = sadd.s32 %s20, 1
      %s55 = smul.u32 %s54, 4
      %s56 = sadd.s32 %s27, 1
      %s57 = smul.u32 %s56, 4
      %s58 = ssub.s32 %s55, %s57
      %p59 = scmp.eq.s32.totalorder %s58, 0
      %s61 = sadd.s32 %s60, 1
      %s62 = scalar_select %p59, %s60, %s61
      %p65 = pneg %p59
      %p66 = scmp.eq.s32.totalorder %s20, 1
      %p67 = por %p65, %p66
      %p68 = scmp.ne.s32.totalorder %s60, %s63
      %p69 = scmp.eq.s32.totalorder %s20, 0
      %p70 = por %p68, %p69
      %p71 = scmp.ne.s32.totalorder %s60, %s63
      %p72 = scmp.eq.s32.totalorder %s25, 1
      %p73 = por %p71, %p72
      %p74 = scmp.ne.s32.totalorder %s63, %s64
      %p75 = scmp.eq.s32.totalorder %s25, 0
      %p76 = por %p74, %p75
      %p77 = scmp.ne.s32.totalorder %s63, %s64
      %p78 = scmp.eq.s32.totalorder %s26, 1
      %p79 = por %p77, %p78
      %p81 = scmp.ne.s32.totalorder %s64, %s80
      %p82 = scmp.eq.s32.totalorder %s26, 0
      %p83 = por %p81, %p82
      %s85 = sadd.s32 %s84, 1
      %p88 = scmp.eq.s32.totalorder %s20, 1
      %p89 = scmp.ne.s32.totalorder %s84, %s86
      %p90 = scmp.eq.s32.totalorder %s20, 0
      %p91 = por %p89, %p90
      %p92 = scmp.ne.s32.totalorder %s84, %s86
      %p93 = scmp.eq.s32.totalorder %s25, 1
      %p94 = por %p92, %p93
      %p95 = scmp.ne.s32.totalorder %s86, %s87
      %p96 = scmp.eq.s32.totalorder %s25, 0
      %p97 = por %p95, %p96
      %p98 = scmp.ne.s32.totalorder %s86, %s87
      %p99 = scmp.eq.s32.totalorder %s26, 1
      %p100 = por %p98, %p99
      %p102 = scmp.ne.s32.totalorder %s87, %s101
      %p103 = scmp.eq.s32.totalorder %s26, 0
      %p104 = por %p102, %p103
      %s106 = sadd.s32 %s105, 1
      %p109 = scmp.eq.s32.totalorder %s20, 1
      %p110 = scmp.ne.s32.totalorder %s105, %s107
      %p111 = scmp.eq.s32.totalorder %s20, 0
      %p112 = por %p110, %p111
      %p113 = scmp.ne.s32.totalorder %s105, %s107
      %p114 = scmp.eq.s32.totalorder %s25, 1
      %p115 = por %p113, %p114
      %p116 = scmp.ne.s32.totalorder %s107, %s108
      %p117 = scmp.eq.s32.totalorder %s25, 0
      %p118 = por %p116, %p117
      %p119 = scmp.ne.s32.totalorder %s107, %s108
      %p120 = scmp.eq.s32.totalorder %s26, 1
      %p121 = por %p119, %p120
      %p123 = scmp.ne.s32.totalorder %s108, %s122
      %p124 = scmp.eq.s32.totalorder %s26, 0
      %p125 = por %p123, %p124
      %s127 = sadd.s32 %s126, 1
      %p130 = scmp.eq.s32.totalorder %s20, 1
      %p131 = scmp.ne.s32.totalorder %s126, %s128
      %p132 = scmp.eq.s32.totalorder %s20, 0
      %p133 = por %p131, %p132
      %p134 = scmp.ne.s32.totalorder %s126, %s128
      %p135 = scmp.eq.s32.totalorder %s25, 1
      %p136 = por %p134, %p135
      %p137 = scmp.ne.s32.totalorder %s128, %s129
      %p138 = scmp.eq.s32.totalorder %s25, 0
      %p139 = por %p137, %p138
      %p140 = scmp.ne.s32.totalorder %s128, %s129
      %p141 = scmp.eq.s32.totalorder %s26, 1
      %p142 = por %p140, %p141
      %p144 = scmp.ne.s32.totalorder %s129, %s143
      %p145 = scmp.eq.s32.totalorder %s26, 0
      %p146 = por %p144, %p145
      %s147 = ssub.s32 %s20, %s27
      %p148 = scmp.eq.s32.totalorder %s147, 0
      %s150 = sadd.s32 %s149, 1
      %s151 = scalar_select %p148, %s149, %s150
      %p154 = pneg %p148
      %p155 = scmp.eq.s32.totalorder %s20, 1
      %p156 = por %p154, %p155
      %p157 = scmp.ne.s32.totalorder %s149, %s152
      %p158 = scmp.eq.s32.totalorder %s20, 0
      %p159 = por %p157, %p158
      %p160 = scmp.ne.s32.totalorder %s149, %s152
      %p161 = scmp.eq.s32.totalorder %s25, 1
      %p162 = por %p160, %p161
      %p163 = scmp.ne.s32.totalorder %s152, %s153
      %p164 = scmp.eq.s32.totalorder %s25, 0
      %p165 = por %p163, %p164
      %p166 = scmp.ne.s32.totalorder %s152, %s153
      %p167 = scmp.eq.s32.totalorder %s26, 1
      %p168 = por %p166, %p167
      %p170 = scmp.ne.s32.totalorder %s153, %s169
      %p171 = scmp.eq.s32.totalorder %s26, 0
      %p172 = por %p170, %p171
      %p173 = scmp.le.s32.totalorder 1, %s20
      %p174 = scmp.lt.s32.totalorder %s20, 3
      %p175 = pnand %p173, %p174
      %p176 = pneg %p175
      // Predicated region
      $region9: #{tpu_custom_call.1} parent=5 // pred_check
        _
      $region10: #{tpu_custom_call.1} parent=5 // pred_check_branch
        %178 = sbr.rel (%p175) target = $region12
      $region11: #{tpu_custom_call.1} parent=5 // pred_region
        %s179 = ssub.s32 %s20, 1
        // Predicated region
        $region13: #{tpu_custom_call.1} parent=11 // pred_check
          %p180 = pneg %p97
        $region14: #{tpu_custom_call.1} parent=11 // pred_check_branch
          %182 = sbr.rel (%p180) target = $region16
        $region15: #{tpu_custom_call.1} parent=11 // pred_region
          %184 = vsyncadd [#allocation6], 0
          %s185 = sshll.u32 %s2, 4
          %s186 = int_to_ptr.hbm [resolvable:$true] %s185
          %s187 = sshll.u32 [#allocation7], 4
          %s188 = int_to_ptr.vmem [resolvable:$true] %s187
          %193 = dma.hbm_to_vmem [thread:$0]  %s186, 9216, %s188, [#allocation6], 64, 64, 4
        $region16: #{tpu_custom_call.1} parent=11 // pred_fallthru
          _
        // Predicated region
        $region17: #{tpu_custom_call.1} parent=11 // pred_check
          %p194 = pneg %p118
        $region18: #{tpu_custom_call.1} parent=11 // pred_check_branch
          %196 = sbr.rel (%p194) target = $region20
        $region19: #{tpu_custom_call.1} parent=11 // pred_region
          _
        $region20: #{tpu_custom_call.1} parent=11 // pred_fallthru
          _
        // Predicated region
        $region21: #{tpu_custom_call.1} parent=11 // pred_check
          %p197 = pneg %p139
        $region22: #{tpu_custom_call.1} parent=11 // pred_check_branch
          %199 = sbr.rel (%p197) target = $region24
        $region23: #{tpu_custom_call.1} parent=11 // pred_region
          _
        $region24: #{tpu_custom_call.1} parent=11 // pred_fallthru
          _
      $region12: #{tpu_custom_call.1} parent=5 // pred_fallthru
        _
      %p200 = scmp.lt.s32.totalorder %s20, 2
      // Predicated region
      $region25: #{tpu_custom_call.1} parent=5 // pred_check
        %p201 = pneg %p200
      $region26: #{tpu_custom_call.1} parent=5 // pred_check_branch
        %203 = sbr.rel (%p201) target = $region28
      $region27: #{tpu_custom_call.1} parent=5 // pred_region
        // Predicated region
        $region29: #{tpu_custom_call.1} parent=27 // pred_check
          %p204 = pneg %p40
        $region30: #{tpu_custom_call.1} parent=27 // pred_check_branch
          %206 = sbr.rel (%p204) target = $region32
        $region31: #{tpu_custom_call.1} parent=27 // pred_region
          %s207 = sand.u32 %s30, 1
          %s208 = scalar_lea.sflag [#allocation3], %s207
          %s209 = sand.u32 %s30, 1
          %s210 = smul.addr %s209, 64
          %s211 = scalar_lea.vmem [#allocation2], %s210
          %s212 = smul.u32 16, %s20
          %s213 = ssub.s32 36, %s212
          %p214 = scmp.lt.s32.totalorder %s213, 16
          %s215 = scalar_select %p214, %s213, 16
          %s216 = smul.u32 4, %s215
          %s217 = ssub.s32 64, %s216
          %s218 = sshll.u32 %s217, 4
          %219 = vsyncadd %s208, %s218
          %p220 = scmp.ne.s32.totalorder 0, %s216
          %s221 = smul.addr %s212, 4
          %s222 = scalar_lea.hbm %s0, %s221
          %s223 = smul.u32 4, %s215
          %s224 = sshll.u32 %s222, 4
          %s225 = int_to_ptr.hbm [resolvable:$true] %s224
          %s226 = sshll.u32 %s211, 4
          %s227 = int_to_ptr.vmem [resolvable:$true] %s226
          %s228 = sshll.u32 %s223, 4
          %232 = dma.hbm_to_vmem [thread:$0]  (%p220), %s225, %s228, %s227, %s208, 64, 64, 4
        $region32: #{tpu_custom_call.1} parent=27 // pred_fallthru
          _
        // Predicated region
        $region33: #{tpu_custom_call.1} parent=27 // pred_check
          %p233 = pneg %p70
        $region34: #{tpu_custom_call.1} parent=27 // pred_check_branch
          %235 = sbr.rel (%p233) target = $region36
        $region35: #{tpu_custom_call.1} parent=27 // pred_region
          %s236 = sand.u32 %s20, 1
          %s237 = scalar_lea.sflag [#allocation6], %s236
          %s238 = sand.u32 %s60, 1
          %s239 = smul.addr %s238, 16
          %s240 = scalar_lea.vmem [#allocation5], %s239
          %s241 = sadd.s32 %s20, 1
          %s242 = smul.u32 %s241, 4
          %s243 = smul.u32 4, %s242
          %245 = vsyncadd %s237, 0
          %s246 = smul.addr %s243, 4
          %s247 = scalar_lea.hbm %s1, %s246
          %s248 = sshll.u32 %s247, 4
          %s249 = int_to_ptr.hbm [resolvable:$true] %s248
          %s250 = sshll.u32 %s240, 4
          %s251 = int_to_ptr.vmem [resolvable:$true] %s250
          %256 = dma.hbm_to_vmem [thread:$0]  %s249, 256, %s251, %s237, 64, 64, 4
        $region36: #{tpu_custom_call.1} parent=27 // pred_fallthru
          _
      $region28: #{tpu_custom_call.1} parent=5 // pred_fallthru
        _
      %p257 = scmp.le.s32.totalorder 1, %s20
      %p258 = scmp.lt.s32.totalorder %s20, 3
      %p259 = pnand %p257, %p258
      %p260 = pneg %p259
      // Predicated region
      $region37: #{tpu_custom_call.1} parent=5 // pred_check
        _
      $region38: #{tpu_custom_call.1} parent=5 // pred_check_branch
        %262 = sbr.rel (%p259) target = $region40
      $region39: #{tpu_custom_call.1} parent=5 // pred_region
        %s263 = ssub.s32 %s20, 1
        %s264 = sand.u32 %s33, 1
        %s265 = scalar_lea.sflag [#allocation3], %s264
        %s266 = sand.u32 %s33, 1
        %s267 = smul.addr %s266, 64
        %s268 = scalar_lea.vmem [#allocation2], %s267
        // Predicated region
        $region41: #{tpu_custom_call.1} parent=39 // pred_check
          %p269 = pneg %p46
        $region42: #{tpu_custom_call.1} parent=39 // pred_check_branch
          %271 = sbr.rel (%p269) target = $region44
        $region43: #{tpu_custom_call.1} parent=39 // pred_region
          %273 = dma.done %s265, 1024
        $region44: #{tpu_custom_call.1} parent=39 // pred_fallthru
          _
        %s274 = sand.u32 %s25, 1
        %s275 = scalar_lea.sflag [#allocation6], %s274
        %s276 = sand.u32 %s63, 1
        %s277 = smul.addr %s276, 16
        %s278 = scalar_lea.vmem [#allocation5], %s277
        // Predicated region
        $region45: #{tpu_custom_call.1} parent=39 // pred_check
          %p279 = pneg %p76
        $region46: #{tpu_custom_call.1} parent=39 // pred_check_branch
          %281 = sbr.rel (%p279) target = $region48
        $region47: #{tpu_custom_call.1} parent=39 // pred_region
          %283 = dma.done %s275, 256
        $region48: #{tpu_custom_call.1} parent=39 // pred_fallthru
          _
        // Predicated region
        $region49: #{tpu_custom_call.1} parent=39 // pred_check
          %p284 = pneg %p97
        $region50: #{tpu_custom_call.1} parent=39 // pred_check_branch
          %286 = sbr.rel (%p284) target = $region52
        $region51: #{tpu_custom_call.1} parent=39 // pred_region
          %288 = dma.done [#allocation6], 9216
        $region52: #{tpu_custom_call.1} parent=39 // pred_fallthru
          _
        %s289 = sand.u32 %s33, 1
        %s290 = scalar_lea.sflag [#allocation3], %s289
        %s291 = sand.u32 %s33, 1
        %s292 = smul.addr %s291, 64
        %s293 = scalar_lea.vmem [#allocation2], %s292
        %p294 = pneg %p46
        %p295 = pneg %p43
        %s296 = sand.u32 %s25, 1
        %s297 = scalar_lea.sflag [#allocation6], %s296
        %s298 = sand.u32 %s63, 1
        %s299 = smul.addr %s298, 16
        %s300 = scalar_lea.vmem [#allocation5], %s299
        %p301 = pneg %p76
        %p302 = pneg %p73
        %p303 = pneg %p97
        %p304 = pneg %p94
        %p305 = pneg %p118
        %p306 = pneg %p115
        %p307 = pneg %p139
        %p308 = pneg %p136
        %p309 = pneg %p165
        %p310 = pneg %p162
        %s311 = sand.u32 %s152, 1
        %s312 = scalar_lea.sflag [#allocation4], %s311
        %s313 = sand.u32 %s152, 1
        %s314 = smul.addr %s313, 64
        %s315 = scalar_lea.vmem [#allocation8], %s314
        %s316 = smul.u32 16, %s25
        %s317 = ssub.s32 36, %s316
        %p318 = scmp.lt.s32.totalorder %s317, 16
        %s319 = scalar_select %p318, %s317, 16
        %s320 = smul.u32 4, %s319
        %s321 = sadd.s32 %s25, 1
        %s322 = smul.u32 %s321, 4
        %s323 = smul.u32 4, %s322
        %s324 = smul.u32 16, %s25
        %v325 = vld [vmem:[%s268] sm:$0xf]
        %v326 = vld [vmem:[%s268 + $0x4] sm:$0xf]
        %v327 = vld [vmem:[%s268 + $0x8] sm:$0xf]
        %v328 = vld [vmem:[%s268 + $0xc] sm:$0xf]
        %v329 = vld [vmem:[%s268 + $0x10] sm:$0xf]
        %v330 = vld [vmem:[%s268 + $0x14] sm:$0xf]
        %v331 = vld [vmem:[%s268 + $0x18] sm:$0xf]
        %v332 = vld [vmem:[%s268 + $0x1c] sm:$0xf]
        %v333 = vld [vmem:[%s268 + $0x20] sm:$0xf]
        %v334 = vld [vmem:[%s268 + $0x24] sm:$0xf]
        %v335 = vld [vmem:[%s268 + $0x28] sm:$0xf]
        %v336 = vld [vmem:[%s268 + $0x2c] sm:$0xf]
        %v337 = vld [vmem:[%s268 + $0x30] sm:$0xf]
        %v338 = vld [vmem:[%s268 + $0x34] sm:$0xf]
        %v339 = vld [vmem:[%s268 + $0x38] sm:$0xf]
        %v340 = vld [vmem:[%s268 + $0x3c] sm:$0xf]
        %v341 = vunpack.c.l.bf16 %v325
        %v342 = vunpack.c.l.bf16 %v326
        %v343 = vunpack.c.l.bf16 %v327
        %v344 = vunpack.c.l.bf16 %v328
        %v345 = vunpack.c.l.bf16 %v329
        %v346 = vunpack.c.l.bf16 %v330
        %v347 = vunpack.c.l.bf16 %v331
        %v348 = vunpack.c.l.bf16 %v332
        %v349 = vunpack.c.l.bf16 %v333
        %v350 = vunpack.c.l.bf16 %v334
        %v351 = vunpack.c.l.bf16 %v335
        %v352 = vunpack.c.l.bf16 %v336
        %v353 = vunpack.c.l.bf16 %v337
        %v354 = vunpack.c.l.bf16 %v338
        %v355 = vunpack.c.l.bf16 %v339
        %v356 = vunpack.c.l.bf16 %v340
        %v357 = vld [vmem:[%s278] sm:$0xf]
        %v358 = vld [vmem:[%s278 + $0x4] sm:$0xf]
        %v359 = vld [vmem:[%s278 + $0x8] sm:$0xf]
        %v360 = vunpack.c.l.bf16 %v357
        %v361 = vunpack.c.l.bf16 %v358
        %v362 = vunpack.c.l.bf16 %v359
        %v363 = vpack.c.bf16 %v341, %v341
        %v364 = vpack.c.bf16 %v342, %v342
        %v365 = vpack.c.bf16 %v343, %v343
        %v366 = vpack.c.bf16 %v344, %v344
        %v367 = vpack.c.bf16 %v345, %v345
        %v368 = vpack.c.bf16 %v346, %v346
        %v369 = vpack.c.bf16 %v347, %v347
        %v370 = vpack.c.bf16 %v348, %v348
        %v371 = vpack.c.bf16 %v349, %v349
        %v372 = vpack.c.bf16 %v350, %v350
        %v373 = vpack.c.bf16 %v351, %v351
        %v374 = vpack.c.bf16 %v352, %v352
        %v375 = vpack.c.bf16 %v353, %v353
        %v376 = vpack.c.bf16 %v354, %v354
        %v377 = vpack.c.bf16 %v355, %v355
        %v378 = vpack.c.bf16 %v356, %v356
        %v379 = vpack.c.bf16 %v360, %v360
        %v380 = vpack.c.bf16 %v361, %v361
        %v381 = vpack.c.bf16 %v362, %v362
        %v398 = vunpack.c.l.b16 %v363
        %v399 = vunpack.c.l.b16 %v364
        %v400 = vunpack.c.l.b16 %v365
        %v401 = vunpack.c.l.b16 %v366
        %v402 = vunpack.c.l.b16 %v367
        %v403 = vunpack.c.l.b16 %v368
        %v404 = vunpack.c.l.b16 %v369
        %v405 = vunpack.c.l.b16 %v370
        %v406 = vunpack.c.l.b16 %v371
        %v407 = vunpack.c.l.b16 %v372
        %v408 = vunpack.c.l.b16 %v373
        %v409 = vunpack.c.l.b16 %v374
        %v410 = vunpack.c.l.b16 %v375
        %v411 = vunpack.c.l.b16 %v376
        %v412 = vunpack.c.l.b16 %v377
        %v413 = vunpack.c.l.b16 %v378
        %v414 = vpack.c.b16 %v399, %v398
        %v415 = vpack.c.b16 %v401, %v400
        %v416 = vpack.c.b16 %v403, %v402
        %v417 = vpack.c.b16 %v405, %v404
        %v418 = vpack.c.b16 %v407, %v406
        %v419 = vpack.c.b16 %v409, %v408
        %v420 = vpack.c.b16 %v411, %v410
        %v421 = vpack.c.b16 %v413, %v412
        %v431 = vunpack.c.l.b16 %v379
        %v432 = vpack.c.b16 %v431, %v431
        %vm433 = vsmask.f32 7424
        %v435 = vshrl.u32 %v414, 16
        %v437 = vshll.u32 %v414, 16
        %v439 = vrot.slane %v437, 1
        %v440 = vor.u32 %v435, %v439
        %v442 = vshll.u32 %v415, 16
        %v444 = vrot.slane %v442, 1
        %v445 = vsel %vm433, %v440, %v444
        %v446 = vshrl.u32 %v415, 16
        %v448 = vor.u32 %v446, %v444
        %v450 = vshll.u32 %v416, 16
        %v452 = vrot.slane %v450, 1
        %v453 = vsel %vm433, %v448, %v452
        %v454 = vshrl.u32 %v416, 16
        %v456 = vor.u32 %v454, %v452
        %v458 = vshll.u32 %v417, 16
        %v460 = vrot.slane %v458, 1
        %v461 = vsel %vm433, %v456, %v460
        %v462 = vshrl.u32 %v417, 16
        %v464 = vor.u32 %v462, %v460
        %v466 = vshll.u32 %v418, 16
        %v468 = vrot.slane %v466, 1
        %v469 = vsel %vm433, %v464, %v468
        %v470 = vshrl.u32 %v418, 16
        %v472 = vor.u32 %v470, %v468
        %v474 = vshll.u32 %v419, 16
        %v476 = vrot.slane %v474, 1
        %v477 = vsel %vm433, %v472, %v476
        %v478 = vshrl.u32 %v419, 16
        %v480 = vor.u32 %v478, %v476
        %v482 = vshll.u32 %v420, 16
        %v484 = vrot.slane %v482, 1
        %v485 = vsel %vm433, %v480, %v484
        %v486 = vshrl.u32 %v420, 16
        %v488 = vor.u32 %v486, %v484
        %v490 = vshll.u32 %v421, 16
        %v492 = vrot.slane %v490, 1
        %v493 = vsel %vm433, %v488, %v492
        %v494 = vshrl.u32 %v421, 16
        %v496 = vor.u32 %v494, %v492
        %v498 = vshll.u32 %v432, 16
        %v500 = vrot.slane %v498, 1
        %v501 = vsel %vm433, %v496, %v500
        %vm510 = vcmask 1046528
        %v511 = vrot.slane %v414, 1
        %v512 = vrot.slane %v415, 1
        %v513 = vsel %vm510, %v511, %v512
        %v514 = vrot.slane %v416, 1
        %v515 = vsel %vm510, %v512, %v514
        %v516 = vrot.slane %v417, 1
        %v517 = vsel %vm510, %v514, %v516
        %v518 = vrot.slane %v418, 1
        %v519 = vsel %vm510, %v516, %v518
        %v520 = vrot.slane %v419, 1
        %v521 = vsel %vm510, %v518, %v520
        %v522 = vrot.slane %v420, 1
        %v523 = vsel %vm510, %v520, %v522
        %v524 = vrot.slane %v421, 1
        %v525 = vsel %vm510, %v522, %v524
        %v526 = vrot.slane %v432, 1
        %v527 = vsel %vm510, %v524, %v526
        %v537 = vunpack.c.l.b16 %v380
        %v538 = vpack.c.b16 %v400, %v399
        %v539 = vpack.c.b16 %v402, %v401
        %v540 = vpack.c.b16 %v404, %v403
        %v541 = vpack.c.b16 %v406, %v405
        %v542 = vpack.c.b16 %v408, %v407
        %v543 = vpack.c.b16 %v410, %v409
        %v544 = vpack.c.b16 %v412, %v411
        %v545 = vpack.c.b16 %v431, %v413
        %v546 = vpack.c.b16 %v537, %v537
        %v547 = vrot.slane %v538, 1
        %v548 = vrot.slane %v539, 1
        %v549 = vsel %vm510, %v547, %v548
        %v550 = vrot.slane %v540, 1
        %v551 = vsel %vm510, %v548, %v550
        %v552 = vrot.slane %v541, 1
        %v553 = vsel %vm510, %v550, %v552
        %v554 = vrot.slane %v542, 1
        %v555 = vsel %vm510, %v552, %v554
        %v556 = vrot.slane %v543, 1
        %v557 = vsel %vm510, %v554, %v556
        %v558 = vrot.slane %v544, 1
        %v559 = vsel %vm510, %v556, %v558
        %v560 = vrot.slane %v545, 1
        %v561 = vsel %vm510, %v558, %v560
        %v562 = vrot.slane %v546, 1
        %v563 = vsel %vm510, %v560, %v562
        %vm572 = vsmask.f32 6400
        %v574 = vshrl.u32 %v538, 16
        %v576 = vrot.slane %v574, 1
        %v577 = vshll.u32 %v538, 16
        %v579 = vrot.slane %v577, 2
        %v580 = vor.u32 %v576, %v579
        %v582 = vshrl.u32 %v539, 16
        %v584 = vrot.slane %v582, 1
        %v585 = vshll.u32 %v539, 16
        %v587 = vrot.slane %v585, 2
        %v588 = vor.u32 %v584, %v587
        %v589 = vsel %vm572, %v580, %v588
        %v591 = vshrl.u32 %v540, 16
        %v593 = vrot.slane %v591, 1
        %v594 = vshll.u32 %v540, 16
        %v596 = vrot.slane %v594, 2
        %v597 = vor.u32 %v593, %v596
        %v598 = vsel %vm572, %v588, %v597
        %v600 = vshrl.u32 %v541, 16
        %v602 = vrot.slane %v600, 1
        %v603 = vshll.u32 %v541, 16
        %v605 = vrot.slane %v603, 2
        %v606 = vor.u32 %v602, %v605
        %v607 = vsel %vm572, %v597, %v606
        %v609 = vshrl.u32 %v542, 16
        %v611 = vrot.slane %v609, 1
        %v612 = vshll.u32 %v542, 16
        %v614 = vrot.slane %v612, 2
        %v615 = vor.u32 %v611, %v614
        %v616 = vsel %vm572, %v606, %v615
        %v618 = vshrl.u32 %v543, 16
        %v620 = vrot.slane %v618, 1
        %v621 = vshll.u32 %v543, 16
        %v623 = vrot.slane %v621, 2
        %v624 = vor.u32 %v620, %v623
        %v625 = vsel %vm572, %v615, %v624
        %v627 = vshrl.u32 %v544, 16
        %v629 = vrot.slane %v627, 1
        %v630 = vshll.u32 %v544, 16
        %v632 = vrot.slane %v630, 2
        %v633 = vor.u32 %v629, %v632
        %v634 = vsel %vm572, %v624, %v633
        %v636 = vshrl.u32 %v545, 16
        %v638 = vrot.slane %v636, 1
        %v639 = vshll.u32 %v545, 16
        %v641 = vrot.slane %v639, 2
        %v642 = vor.u32 %v638, %v641
        %v643 = vsel %vm572, %v633, %v642
        %v645 = vshrl.u32 %v546, 16
        %v647 = vrot.slane %v645, 1
        %v648 = vshll.u32 %v546, 16
        %v650 = vrot.slane %v648, 2
        %v651 = vor.u32 %v647, %v650
        %v652 = vsel %vm572, %v642, %v651
        %vm661 = vcmask 1045504
        %v662 = vrot.slane %v538, 2
        %v663 = vrot.slane %v539, 2
        %v664 = vsel %vm661, %v662, %v663
        %v665 = vrot.slane %v540, 2
        %v666 = vsel %vm661, %v663, %v665
        %v667 = vrot.slane %v541, 2
        %v668 = vsel %vm661, %v665, %v667
        %v669 = vrot.slane %v542, 2
        %v670 = vsel %vm661, %v667, %v669
        %v671 = vrot.slane %v543, 2
        %v672 = vsel %vm661, %v669, %v671
        %v673 = vrot.slane %v544, 2
        %v674 = vsel %vm661, %v671, %v673
        %v675 = vrot.slane %v545, 2
        %v676 = vsel %vm661, %v673, %v675
        %v677 = vrot.slane %v546, 2
        %v678 = vsel %vm661, %v675, %v677
        %v688 = vunpack.c.l.b16 %v381
        %v689 = vpack.c.b16 %v537, %v431
        %v690 = vpack.c.b16 %v688, %v688
        %v691 = vrot.slane %v415, 2
        %v692 = vrot.slane %v416, 2
        %v693 = vsel %vm661, %v691, %v692
        %v694 = vrot.slane %v417, 2
        %v695 = vsel %vm661, %v692, %v694
        %v696 = vrot.slane %v418, 2
        %v697 = vsel %vm661, %v694, %v696
        %v698 = vrot.slane %v419, 2
        %v699 = vsel %vm661, %v696, %v698
        %v700 = vrot.slane %v420, 2
        %v701 = vsel %vm661, %v698, %v700
        %v702 = vrot.slane %v421, 2
        %v703 = vsel %vm661, %v700, %v702
        %v704 = vrot.slane %v689, 2
        %v705 = vsel %vm661, %v702, %v704
        %v706 = vrot.slane %v690, 2
        %v707 = vsel %vm661, %v704, %v706
        %vm716 = vsmask.f32 5376
        %v717 = vrot.slane %v446, 2
        %v718 = vrot.slane %v442, 3
        %v719 = vor.u32 %v717, %v718
        %v720 = vrot.slane %v454, 2
        %v721 = vrot.slane %v450, 3
        %v722 = vor.u32 %v720, %v721
        %v723 = vsel %vm716, %v719, %v722
        %v724 = vrot.slane %v462, 2
        %v725 = vrot.slane %v458, 3
        %v726 = vor.u32 %v724, %v725
        %v727 = vsel %vm716, %v722, %v726
        %v728 = vrot.slane %v470, 2
        %v729 = vrot.slane %v466, 3
        %v730 = vor.u32 %v728, %v729
        %v731 = vsel %vm716, %v726, %v730
        %v732 = vrot.slane %v478, 2
        %v733 = vrot.slane %v474, 3
        %v734 = vor.u32 %v732, %v733
        %v735 = vsel %vm716, %v730, %v734
        %v736 = vrot.slane %v486, 2
        %v737 = vrot.slane %v482, 3
        %v738 = vor.u32 %v736, %v737
        %v739 = vsel %vm716, %v734, %v738
        %v740 = vrot.slane %v494, 2
        %v741 = vrot.slane %v490, 3
        %v742 = vor.u32 %v740, %v741
        %v743 = vsel %vm716, %v738, %v742
        %v745 = vshrl.u32 %v689, 16
        %v747 = vrot.slane %v745, 2
        %v748 = vshll.u32 %v689, 16
        %v750 = vrot.slane %v748, 3
        %v751 = vor.u32 %v747, %v750
        %v752 = vsel %vm716, %v742, %v751
        %v754 = vshrl.u32 %v690, 16
        %v756 = vrot.slane %v754, 2
        %v757 = vshll.u32 %v690, 16
        %v759 = vrot.slane %v757, 3
        %v760 = vor.u32 %v756, %v759
        %v761 = vsel %vm716, %v751, %v760
        %vm770 = vcmask 1044480
        %v771 = vrot.slane %v415, 3
        %v772 = vrot.slane %v416, 3
        %v773 = vsel %vm770, %v771, %v772
        %v774 = vrot.slane %v417, 3
        %v775 = vsel %vm770, %v772, %v774
        %v776 = vrot.slane %v418, 3
        %v777 = vsel %vm770, %v774, %v776
        %v778 = vrot.slane %v419, 3
        %v779 = vsel %vm770, %v776, %v778
        %v780 = vrot.slane %v420, 3
        %v781 = vsel %vm770, %v778, %v780
        %v782 = vrot.slane %v421, 3
        %v783 = vsel %vm770, %v780, %v782
        %v784 = vrot.slane %v689, 3
        %v785 = vsel %vm770, %v782, %v784
        %v786 = vrot.slane %v690, 3
        %v787 = vsel %vm770, %v784, %v786
        %v796 = vld [vmem:[#allocation7] sm:$0xf]
        %v797 = vld [vmem:[#allocation7 + $0x4] sm:$0xf]
        %v798 = vld [vmem:[#allocation7 + $0x8] sm:$0xf]
        %v799 = vld [vmem:[#allocation7 + $0xc] sm:$0xf]
        %v800 = vld [vmem:[#allocation7 + $0x10] sm:$0xf]
        %v801 = vld [vmem:[#allocation7 + $0x14] sm:$0xf]
        %v802 = vld [vmem:[#allocation7 + $0x18] sm:$0xf]
        %v803 = vld [vmem:[#allocation7 + $0x1c] sm:$0xf]
        %v804 = vld [vmem:[#allocation7 + $0x20] sm:$0xf]
        %v805 = vld [vmem:[#allocation7 + $0x24] sm:$0xf]
        %v806 = vld [vmem:[#allocation7 + $0x28] sm:$0xf]
        %v807 = vld [vmem:[#allocation7 + $0x2c] sm:$0xf]
        %v808 = vld [vmem:[#allocation7 + $0x30] sm:$0xf]
        %v809 = vld [vmem:[#allocation7 + $0x34] sm:$0xf]
        %v810 = vld [vmem:[#allocation7 + $0x38] sm:$0xf]
        %v811 = vld [vmem:[#allocation7 + $0x3c] sm:$0xf]
        %v812 = vld [vmem:[#allocation7 + $0x40] sm:$0xf]
        %v813 = vld [vmem:[#allocation7 + $0x44] sm:$0xf]
        %v814 = vld [vmem:[#allocation7 + $0x48] sm:$0xf]
        %v815 = vld [vmem:[#allocation7 + $0x4c] sm:$0xf]
        %v816 = vld [vmem:[#allocation7 + $0x50] sm:$0xf]
        %v817 = vld [vmem:[#allocation7 + $0x54] sm:$0xf]
        %v818 = vld [vmem:[#allocation7 + $0x58] sm:$0xf]
        %v819 = vld [vmem:[#allocation7 + $0x5c] sm:$0xf]
        %v820 = vld [vmem:[#allocation7 + $0x60] sm:$0xf]
        %v821 = vld [vmem:[#allocation7 + $0x64] sm:$0xf]
        %v822 = vld [vmem:[#allocation7 + $0x68] sm:$0xf]
        %v823 = vld [vmem:[#allocation7 + $0x6c] sm:$0xf]
        %v824 = vld [vmem:[#allocation7 + $0x70] sm:$0xf]
        %v825 = vld [vmem:[#allocation7 + $0x74] sm:$0xf]
        %v826 = vld [vmem:[#allocation7 + $0x78] sm:$0xf]
        %v827 = vld [vmem:[#allocation7 + $0x7c] sm:$0xf]
        %v828 = vld [vmem:[#allocation7 + $0x80] sm:$0xf]
        %v829 = vld [vmem:[#allocation7 + $0x84] sm:$0xf]
        %v830 = vld [vmem:[#allocation7 + $0x88] sm:$0xf]
        %v831 = vld [vmem:[#allocation7 + $0x8c] sm:$0xf]
        %v832 = vld [vmem:[#allocation7 + $0x90] sm:$0xf]
        %v833 = vld [vmem:[#allocation7 + $0x94] sm:$0xf]
        %v834 = vld [vmem:[#allocation7 + $0x98] sm:$0xf]
        %v835 = vld [vmem:[#allocation7 + $0x9c] sm:$0xf]
        %v836 = vld [vmem:[#allocation7 + $0xa0] sm:$0xf]
        %v837 = vld [vmem:[#allocation7 + $0xa4] sm:$0xf]
        %v838 = vld [vmem:[#allocation7 + $0xa8] sm:$0xf]
        %v839 = vld [vmem:[#allocation7 + $0xac] sm:$0xf]
        %v840 = vld [vmem:[#allocation7 + $0xb0] sm:$0xf]
        %v841 = vld [vmem:[#allocation7 + $0xb4] sm:$0xf]
        %v842 = vld [vmem:[#allocation7 + $0xb8] sm:$0xf]
        %v843 = vld [vmem:[#allocation7 + $0xbc] sm:$0xf]
        %v844 = vld [vmem:[#allocation7 + $0xc0] sm:$0xf]
        %v845 = vld [vmem:[#allocation7 + $0xc4] sm:$0xf]
        %v846 = vld [vmem:[#allocation7 + $0xc8] sm:$0xf]
        %v847 = vld [vmem:[#allocation7 + $0xcc] sm:$0xf]
        %v848 = vld [vmem:[#allocation7 + $0xd0] sm:$0xf]
        %v849 = vld [vmem:[#allocation7 + $0xd4] sm:$0xf]
        %v850 = vld [vmem:[#allocation7 + $0xd8] sm:$0xf]
        %v851 = vld [vmem:[#allocation7 + $0xdc] sm:$0xf]
        %v852 = vld [vmem:[#allocation7 + $0xe0] sm:$0xf]
        %v853 = vld [vmem:[#allocation7 + $0xe4] sm:$0xf]
        %v854 = vld [vmem:[#allocation7 + $0xe8] sm:$0xf]
        %v855 = vld [vmem:[#allocation7 + $0xec] sm:$0xf]
        %v856 = vld [vmem:[#allocation7 + $0xf0] sm:$0xf]
        %v857 = vld [vmem:[#allocation7 + $0xf4] sm:$0xf]
        %v858 = vld [vmem:[#allocation7 + $0xf8] sm:$0xf]
        %v859 = vld [vmem:[#allocation7 + $0xfc] sm:$0xf]
        %v860 = vld [vmem:[#allocation7 + $0x100] sm:$0xf]
        %v861 = vld [vmem:[#allocation7 + $0x104] sm:$0xf]
        %v862 = vld [vmem:[#allocation7 + $0x108] sm:$0xf]
        %v863 = vld [vmem:[#allocation7 + $0x10c] sm:$0xf]
        %v864 = vld [vmem:[#allocation7 + $0x110] sm:$0xf]
        %v865 = vld [vmem:[#allocation7 + $0x114] sm:$0xf]
        %v866 = vld [vmem:[#allocation7 + $0x118] sm:$0xf]
        %v867 = vld [vmem:[#allocation7 + $0x11c] sm:$0xf]
        %v868 = vld [vmem:[#allocation7 + $0x120] sm:$0xf]
        %v869 = vld [vmem:[#allocation7 + $0x124] sm:$0xf]
        %v870 = vld [vmem:[#allocation7 + $0x128] sm:$0xf]
        %v871 = vld [vmem:[#allocation7 + $0x12c] sm:$0xf]
        %v872 = vld [vmem:[#allocation7 + $0x130] sm:$0xf]
        %v873 = vld [vmem:[#allocation7 + $0x134] sm:$0xf]
        %v874 = vld [vmem:[#allocation7 + $0x138] sm:$0xf]
        %v875 = vld [vmem:[#allocation7 + $0x13c] sm:$0xf]
        %v876 = vld [vmem:[#allocation7 + $0x140] sm:$0xf]
        %v877 = vld [vmem:[#allocation7 + $0x144] sm:$0xf]
        %v878 = vld [vmem:[#allocation7 + $0x148] sm:$0xf]
        %v879 = vld [vmem:[#allocation7 + $0x14c] sm:$0xf]
        %v880 = vld [vmem:[#allocation7 + $0x150] sm:$0xf]
        %v881 = vld [vmem:[#allocation7 + $0x154] sm:$0xf]
        %v882 = vld [vmem:[#allocation7 + $0x158] sm:$0xf]
        %v883 = vld [vmem:[#allocation7 + $0x15c] sm:$0xf]
        %v884 = vld [vmem:[#allocation7 + $0x160] sm:$0xf]
        %v885 = vld [vmem:[#allocation7 + $0x164] sm:$0xf]
        %v886 = vld [vmem:[#allocation7 + $0x168] sm:$0xf]
        %v887 = vld [vmem:[#allocation7 + $0x16c] sm:$0xf]
        %v888 = vld [vmem:[#allocation7 + $0x170] sm:$0xf]
        %v889 = vld [vmem:[#allocation7 + $0x174] sm:$0xf]
        %v890 = vld [vmem:[#allocation7 + $0x178] sm:$0xf]
        %v891 = vld [vmem:[#allocation7 + $0x17c] sm:$0xf]
        %v892 = vld [vmem:[#allocation7 + $0x180] sm:$0xf]
        %v893 = vld [vmem:[#allocation7 + $0x184] sm:$0xf]
        %v894 = vld [vmem:[#allocation7 + $0x188] sm:$0xf]
        %v895 = vld [vmem:[#allocation7 + $0x18c] sm:$0xf]
        %v896 = vld [vmem:[#allocation7 + $0x190] sm:$0xf]
        %v897 = vld [vmem:[#allocation7 + $0x194] sm:$0xf]
        %v898 = vld [vmem:[#allocation7 + $0x198] sm:$0xf]
        %v899 = vld [vmem:[#allocation7 + $0x19c] sm:$0xf]
        %v900 = vld [vmem:[#allocation7 + $0x1a0] sm:$0xf]
        %v901 = vld [vmem:[#allocation7 + $0x1a4] sm:$0xf]
        %v902 = vld [vmem:[#allocation7 + $0x1a8] sm:$0xf]
        %v903 = vld [vmem:[#allocation7 + $0x1ac] sm:$0xf]
        %v904 = vld [vmem:[#allocation7 + $0x1b0] sm:$0xf]
        %v905 = vld [vmem:[#allocation7 + $0x1b4] sm:$0xf]
        %v906 = vld [vmem:[#allocation7 + $0x1b8] sm:$0xf]
        %v907 = vld [vmem:[#allocation7 + $0x1bc] sm:$0xf]
        %v908 = vld [vmem:[#allocation7 + $0x1c0] sm:$0xf]
        %v909 = vld [vmem:[#allocation7 + $0x1c4] sm:$0xf]
        %v910 = vld [vmem:[#allocation7 + $0x1c8] sm:$0xf]
        %v911 = vld [vmem:[#allocation7 + $0x1cc] sm:$0xf]
        %v912 = vld [vmem:[#allocation7 + $0x1d0] sm:$0xf]
        %v913 = vld [vmem:[#allocation7 + $0x1d4] sm:$0xf]
        %v914 = vld [vmem:[#allocation7 + $0x1d8] sm:$0xf]
        %v915 = vld [vmem:[#allocation7 + $0x1dc] sm:$0xf]
        %v916 = vld [vmem:[#allocation7 + $0x1e0] sm:$0xf]
        %v917 = vld [vmem:[#allocation7 + $0x1e4] sm:$0xf]
        %v918 = vld [vmem:[#allocation7 + $0x1e8] sm:$0xf]
        %v919 = vld [vmem:[#allocation7 + $0x1ec] sm:$0xf]
        %v920 = vld [vmem:[#allocation7 + $0x1f0] sm:$0xf]
        %v921 = vld [vmem:[#allocation7 + $0x1f4] sm:$0xf]
        %v922 = vld [vmem:[#allocation7 + $0x1f8] sm:$0xf]
        %v923 = vld [vmem:[#allocation7 + $0x1fc] sm:$0xf]
        %v924 = vld [vmem:[#allocation7 + $0x200] sm:$0xf]
        %v925 = vld [vmem:[#allocation7 + $0x204] sm:$0xf]
        %v926 = vld [vmem:[#allocation7 + $0x208] sm:$0xf]
        %v927 = vld [vmem:[#allocation7 + $0x20c] sm:$0xf]
        %v928 = vld [vmem:[#allocation7 + $0x210] sm:$0xf]
        %v929 = vld [vmem:[#allocation7 + $0x214] sm:$0xf]
        %v930 = vld [vmem:[#allocation7 + $0x218] sm:$0xf]
        %v931 = vld [vmem:[#allocation7 + $0x21c] sm:$0xf]
        %v932 = vld [vmem:[#allocation7 + $0x220] sm:$0xf]
        %v933 = vld [vmem:[#allocation7 + $0x224] sm:$0xf]
        %v934 = vld [vmem:[#allocation7 + $0x228] sm:$0xf]
        %v935 = vld [vmem:[#allocation7 + $0x22c] sm:$0xf]
        %v936 = vld [vmem:[#allocation7 + $0x230] sm:$0xf]
        %v937 = vld [vmem:[#allocation7 + $0x234] sm:$0xf]
        %v938 = vld [vmem:[#allocation7 + $0x238] sm:$0xf]
        %v939 = vld [vmem:[#allocation7 + $0x23c] sm:$0xf]
        %v1084 = vunpack.c.l.b16 %v796
        %v1085 = vunpack.c.l.b16 %v797
        %v1086 = vunpack.c.l.b16 %v798
        %v1087 = vunpack.c.l.b16 %v799
        %v1088 = vunpack.c.l.b16 %v800
        %v1089 = vunpack.c.l.b16 %v801
        %v1090 = vunpack.c.l.b16 %v802
        %v1091 = vunpack.c.l.b16 %v803
        %v1092 = vunpack.c.l.b16 %v804
        %v1093 = vunpack.c.l.b16 %v805
        %v1094 = vunpack.c.l.b16 %v806
        %v1095 = vunpack.c.l.b16 %v807
        %v1096 = vunpack.c.l.b16 %v808
        %v1097 = vunpack.c.l.b16 %v809
        %v1098 = vunpack.c.l.b16 %v810
        %v1099 = vunpack.c.l.b16 %v811
        %v1100 = vunpack.c.l.b16 %v812
        %v1101 = vunpack.c.l.b16 %v813
        %v1102 = vunpack.c.l.b16 %v814
        %v1103 = vunpack.c.l.b16 %v815
        %v1104 = vunpack.c.l.b16 %v816
        %v1105 = vunpack.c.l.b16 %v817
        %v1106 = vunpack.c.l.b16 %v818
        %v1107 = vunpack.c.l.b16 %v819
        %v1108 = vunpack.c.l.b16 %v820
        %v1109 = vunpack.c.l.b16 %v821
        %v1110 = vunpack.c.l.b16 %v822
        %v1111 = vunpack.c.l.b16 %v823
        %v1112 = vunpack.c.l.b16 %v824
        %v1113 = vunpack.c.l.b16 %v825
        %v1114 = vunpack.c.l.b16 %v826
        %v1115 = vunpack.c.l.b16 %v827
        %v1116 = vunpack.c.l.b16 %v828
        %v1117 = vunpack.c.l.b16 %v829
        %v1118 = vunpack.c.l.b16 %v830
        %v1119 = vunpack.c.l.b16 %v831
        %v1120 = vunpack.c.l.b16 %v832
        %v1121 = vunpack.c.l.b16 %v833
        %v1122 = vunpack.c.l.b16 %v834
        %v1123 = vunpack.c.l.b16 %v835
        %v1124 = vunpack.c.l.b16 %v836
        %v1125 = vunpack.c.l.b16 %v837
        %v1126 = vunpack.c.l.b16 %v838
        %v1127 = vunpack.c.l.b16 %v839
        %v1128 = vunpack.c.l.b16 %v840
        %v1129 = vunpack.c.l.b16 %v841
        %v1130 = vunpack.c.l.b16 %v842
        %v1131 = vunpack.c.l.b16 %v843
        %v1132 = vunpack.c.l.b16 %v844
        %v1133 = vunpack.c.l.b16 %v845
        %v1134 = vunpack.c.l.b16 %v846
        %v1135 = vunpack.c.l.b16 %v847
        %v1136 = vunpack.c.l.b16 %v848
        %v1137 = vunpack.c.l.b16 %v849
        %v1138 = vunpack.c.l.b16 %v850
        %v1139 = vunpack.c.l.b16 %v851
        %v1140 = vunpack.c.l.b16 %v852
        %v1141 = vunpack.c.l.b16 %v853
        %v1142 = vunpack.c.l.b16 %v854
        %v1143 = vunpack.c.l.b16 %v855
        %v1144 = vunpack.c.l.b16 %v856
        %v1145 = vunpack.c.l.b16 %v857
        %v1146 = vunpack.c.l.b16 %v858
        %v1147 = vunpack.c.l.b16 %v859
        %v1148 = vunpack.c.l.b16 %v860
        %v1149 = vunpack.c.l.b16 %v861
        %v1150 = vunpack.c.l.b16 %v862
        %v1151 = vunpack.c.l.b16 %v863
        %v1152 = vunpack.c.l.b16 %v864
        %v1153 = vunpack.c.l.b16 %v865
        %v1154 = vunpack.c.l.b16 %v866
        %v1155 = vunpack.c.l.b16 %v867
        %v1156 = vunpack.c.l.b16 %v868
        %v1157 = vunpack.c.l.b16 %v869
        %v1158 = vunpack.c.l.b16 %v870
        %v1159 = vunpack.c.l.b16 %v871
        %v1160 = vunpack.c.l.b16 %v872
        %v1161 = vunpack.c.l.b16 %v873
        %v1162 = vunpack.c.l.b16 %v874
        %v1163 = vunpack.c.l.b16 %v875
        %v1164 = vunpack.c.l.b16 %v876
        %v1165 = vunpack.c.l.b16 %v877
        %v1166 = vunpack.c.l.b16 %v878
        %v1167 = vunpack.c.l.b16 %v879
        %v1168 = vunpack.c.l.b16 %v880
        %v1169 = vunpack.c.l.b16 %v881
        %v1170 = vunpack.c.l.b16 %v882
        %v1171 = vunpack.c.l.b16 %v883
        %v1172 = vunpack.c.l.b16 %v884
        %v1173 = vunpack.c.l.b16 %v885
        %v1174 = vunpack.c.l.b16 %v886
        %v1175 = vunpack.c.l.b16 %v887
        %v1176 = vunpack.c.l.b16 %v888
        %v1177 = vunpack.c.l.b16 %v889
        %v1178 = vunpack.c.l.b16 %v890
        %v1179 = vunpack.c.l.b16 %v891
        %v1180 = vunpack.c.l.b16 %v892
        %v1181 = vunpack.c.l.b16 %v893
        %v1182 = vunpack.c.l.b16 %v894
        %v1183 = vunpack.c.l.b16 %v895
        %v1184 = vunpack.c.l.b16 %v896
        %v1185 = vunpack.c.l.b16 %v897
        %v1186 = vunpack.c.l.b16 %v898
        %v1187 = vunpack.c.l.b16 %v899
        %v1188 = vunpack.c.l.b16 %v900
        %v1189 = vunpack.c.l.b16 %v901
        %v1190 = vunpack.c.l.b16 %v902
        %v1191 = vunpack.c.l.b16 %v903
        %v1192 = vunpack.c.l.b16 %v904
        %v1193 = vunpack.c.l.b16 %v905
        %v1194 = vunpack.c.l.b16 %v906
        %v1195 = vunpack.c.l.b16 %v907
        %v1196 = vunpack.c.l.b16 %v908
        %v1197 = vunpack.c.l.b16 %v909
        %v1198 = vunpack.c.l.b16 %v910
        %v1199 = vunpack.c.l.b16 %v911
        %v1200 = vunpack.c.l.b16 %v912
        %v1201 = vunpack.c.l.b16 %v913
        %v1202 = vunpack.c.l.b16 %v914
        %v1203 = vunpack.c.l.b16 %v915
        %v1204 = vunpack.c.l.b16 %v916
        %v1205 = vunpack.c.l.b16 %v917
        %v1206 = vunpack.c.l.b16 %v918
        %v1207 = vunpack.c.l.b16 %v919
        %v1208 = vunpack.c.l.b16 %v920
        %v1209 = vunpack.c.l.b16 %v921
        %v1210 = vunpack.c.l.b16 %v922
        %v1211 = vunpack.c.l.b16 %v923
        %v1212 = vunpack.c.l.b16 %v924
        %v1213 = vunpack.c.l.b16 %v925
        %v1214 = vunpack.c.l.b16 %v926
        %v1215 = vunpack.c.l.b16 %v927
        %v1216 = vunpack.c.l.b16 %v928
        %v1217 = vunpack.c.l.b16 %v929
        %v1218 = vunpack.c.l.b16 %v930
        %v1219 = vunpack.c.l.b16 %v931
        %v1220 = vunpack.c.l.b16 %v932
        %v1221 = vunpack.c.l.b16 %v933
        %v1222 = vunpack.c.l.b16 %v934
        %v1223 = vunpack.c.l.b16 %v935
        %v1224 = vunpack.c.l.b16 %v936
        %v1225 = vunpack.c.l.b16 %v937
        %v1226 = vunpack.c.l.b16 %v938
        %v1227 = vunpack.c.l.b16 %v939
        %v1228 = vpack.c.b16 %v1085, %v1084
        %v1229 = vpack.c.b16 %v1087, %v1086
        %v1230 = vpack.c.b16 %v1089, %v1088
        %v1231 = vpack.c.b16 %v1091, %v1090
        %v1232 = vpack.c.b16 %v1093, %v1092
        %v1233 = vpack.c.b16 %v1095, %v1094
        %v1234 = vpack.c.b16 %v1097, %v1096
        %v1235 = vpack.c.b16 %v1099, %v1098
        %v1236 = vpack.c.b16 %v1101, %v1100
        %v1237 = vpack.c.b16 %v1103, %v1102
        %v1238 = vpack.c.b16 %v1105, %v1104
        %v1239 = vpack.c.b16 %v1107, %v1106
        %v1240 = vpack.c.b16 %v1109, %v1108
        %v1241 = vpack.c.b16 %v1111, %v1110
        %v1242 = vpack.c.b16 %v1113, %v1112
        %v1243 = vpack.c.b16 %v1115, %v1114
        %v1244 = vpack.c.b16 %v1117, %v1116
        %v1245 = vpack.c.b16 %v1119, %v1118
        %v1246 = vpack.c.b16 %v1121, %v1120
        %v1247 = vpack.c.b16 %v1123, %v1122
        %v1248 = vpack.c.b16 %v1125, %v1124
        %v1249 = vpack.c.b16 %v1127, %v1126
        %v1250 = vpack.c.b16 %v1129, %v1128
        %v1251 = vpack.c.b16 %v1131, %v1130
        %v1252 = vpack.c.b16 %v1133, %v1132
        %v1253 = vpack.c.b16 %v1135, %v1134
        %v1254 = vpack.c.b16 %v1137, %v1136
        %v1255 = vpack.c.b16 %v1139, %v1138
        %v1256 = vpack.c.b16 %v1141, %v1140
        %v1257 = vpack.c.b16 %v1143, %v1142
        %v1258 = vpack.c.b16 %v1145, %v1144
        %v1259 = vpack.c.b16 %v1147, %v1146
        %v1260 = vpack.c.b16 %v1149, %v1148
        %v1261 = vpack.c.b16 %v1151, %v1150
        %v1262 = vpack.c.b16 %v1153, %v1152
        %v1263 = vpack.c.b16 %v1155, %v1154
        %v1264 = vpack.c.b16 %v1157, %v1156
        %v1265 = vpack.c.b16 %v1159, %v1158
        %v1266 = vpack.c.b16 %v1161, %v1160
        %v1267 = vpack.c.b16 %v1163, %v1162
        %v1268 = vpack.c.b16 %v1165, %v1164
        %v1269 = vpack.c.b16 %v1167, %v1166
        %v1270 = vpack.c.b16 %v1169, %v1168
        %v1271 = vpack.c.b16 %v1171, %v1170
        %v1272 = vpack.c.b16 %v1173, %v1172
        %v1273 = vpack.c.b16 %v1175, %v1174
        %v1274 = vpack.c.b16 %v1177, %v1176
        %v1275 = vpack.c.b16 %v1179, %v1178
        %v1276 = vpack.c.b16 %v1181, %v1180
        %v1277 = vpack.c.b16 %v1183, %v1182
        %v1278 = vpack.c.b16 %v1185, %v1184
        %v1279 = vpack.c.b16 %v1187, %v1186
        %v1280 = vpack.c.b16 %v1189, %v1188
        %v1281 = vpack.c.b16 %v1191, %v1190
        %v1282 = vpack.c.b16 %v1193, %v1192
        %v1283 = vpack.c.b16 %v1195, %v1194
        %v1284 = vpack.c.b16 %v1197, %v1196
        %v1285 = vpack.c.b16 %v1199, %v1198
        %v1286 = vpack.c.b16 %v1201, %v1200
        %v1287 = vpack.c.b16 %v1203, %v1202
        %v1288 = vpack.c.b16 %v1205, %v1204
        %v1289 = vpack.c.b16 %v1207, %v1206
        %v1290 = vpack.c.b16 %v1209, %v1208
        %v1291 = vpack.c.b16 %v1211, %v1210
        %v1292 = vpack.c.b16 %v1213, %v1212
        %v1293 = vpack.c.b16 %v1215, %v1214
        %v1294 = vpack.c.b16 %v1217, %v1216
        %v1295 = vpack.c.b16 %v1219, %v1218
        %v1296 = vpack.c.b16 %v1221, %v1220
        %v1297 = vpack.c.b16 %v1223, %v1222
        %v1298 = vpack.c.b16 %v1225, %v1224
        %v1299 = vpack.c.b16 %v1227, %v1226
        %1372 = vmatpush.bf16.msra.mxu0 %v1235
        %1373 = vmatpush.bf16.msra.mxu0 %v1234
        %1374 = vmatpush.bf16.msra.mxu0 %v1233
        %1375 = vmatpush.bf16.msra.mxu0 %v1232
        %1376 = vmatpush.bf16.msra.mxu0 %v1231
        %1377 = vmatpush.bf16.msra.mxu0 %v1230
        %1378 = vmatpush.bf16.msra.mxu0 %v1229
        %1379 = vmatpush.bf16.msra.mxu0 %v1228
        %1380 = vmatmul.bf16.gmra.mxu0 %v414
        %v1381 = vpop.f32.mrf.mxu0
        %v1382 = vadd.f32 0.0, %v1381
        %v1383 = vpop.f32.mrf.mxu0
        %v1384 = vadd.f32 0.0, %v1383
        %1385 = vmatmul.bf16.gmra.mxu0 %v415
        %v1386 = vpop.f32.mrf.mxu0
        %v1387 = vadd.f32 0.0, %v1386
        %v1388 = vpop.f32.mrf.mxu0
        %v1389 = vadd.f32 0.0, %v1388
        %1390 = vmatmul.bf16.gmra.mxu0 %v416
        %v1391 = vpop.f32.mrf.mxu0
        %v1392 = vadd.f32 0.0, %v1391
        %v1393 = vpop.f32.mrf.mxu0
        %v1394 = vadd.f32 0.0, %v1393
        %1395 = vmatmul.bf16.gmra.mxu0 %v417
        %v1396 = vpop.f32.mrf.mxu0
        %v1397 = vadd.f32 0.0, %v1396
        %v1398 = vpop.f32.mrf.mxu0
        %v1399 = vadd.f32 0.0, %v1398
        %1400 = vmatmul.bf16.gmra.mxu0 %v418
        %v1401 = vpop.f32.mrf.mxu0
        %v1402 = vadd.f32 0.0, %v1401
        %v1403 = vpop.f32.mrf.mxu0
        %v1404 = vadd.f32 0.0, %v1403
        %1405 = vmatmul.bf16.gmra.mxu0 %v419
        %v1406 = vpop.f32.mrf.mxu0
        %v1407 = vadd.f32 0.0, %v1406
        %v1408 = vpop.f32.mrf.mxu0
        %v1409 = vadd.f32 0.0, %v1408
        %1410 = vmatmul.bf16.gmra.mxu0 %v420
        %v1411 = vpop.f32.mrf.mxu0
        %v1412 = vadd.f32 0.0, %v1411
        %v1413 = vpop.f32.mrf.mxu0
        %v1414 = vadd.f32 0.0, %v1413
        %1415 = vmatmul.bf16.gmra.mxu0 %v421
        %v1416 = vpop.f32.mrf.mxu0
        %v1417 = vadd.f32 0.0, %v1416
        %v1418 = vpop.f32.mrf.mxu0
        %v1419 = vadd.f32 0.0, %v1418
        %1420 = vdwg.mxu0
        %1421 = vmatpush.bf16.msra.mxu0 %v1243
        %1422 = vmatpush.bf16.msra.mxu0 %v1242
        %1423 = vmatpush.bf16.msra.mxu0 %v1241
        %1424 = vmatpush.bf16.msra.mxu0 %v1240
        %1425 = vmatpush.bf16.msra.mxu0 %v1239
        %1426 = vmatpush.bf16.msra.mxu0 %v1238
        %1427 = vmatpush.bf16.msra.mxu0 %v1237
        %1428 = vmatpush.bf16.msra.mxu0 %v1236
        %1429 = vmatmul.bf16.gmra.mxu0 %v445
        %v1430 = vpop.f32.mrf.mxu0
        %v1431 = vadd.f32 %v1382, %v1430
        %v1432 = vpop.f32.mrf.mxu0
        %v1433 = vadd.f32 %v1384, %v1432
        %1434 = vmatmul.bf16.gmra.mxu0 %v453
        %v1435 = vpop.f32.mrf.mxu0
        %v1436 = vadd.f32 %v1387, %v1435
        %v1437 = vpop.f32.mrf.mxu0
        %v1438 = vadd.f32 %v1389, %v1437
        %1439 = vmatmul.bf16.gmra.mxu0 %v461
        %v1440 = vpop.f32.mrf.mxu0
        %v1441 = vadd.f32 %v1392, %v1440
        %v1442 = vpop.f32.mrf.mxu0
        %v1443 = vadd.f32 %v1394, %v1442
        %1444 = vmatmul.bf16.gmra.mxu0 %v469
        %v1445 = vpop.f32.mrf.mxu0
        %v1446 = vadd.f32 %v1397, %v1445
        %v1447 = vpop.f32.mrf.mxu0
        %v1448 = vadd.f32 %v1399, %v1447
        %1449 = vmatmul.bf16.gmra.mxu0 %v477
        %v1450 = vpop.f32.mrf.mxu0
        %v1451 = vadd.f32 %v1402, %v1450
        %v1452 = vpop.f32.mrf.mxu0
        %v1453 = vadd.f32 %v1404, %v1452
        %1454 = vmatmul.bf16.gmra.mxu0 %v485
        %v1455 = vpop.f32.mrf.mxu0
        %v1456 = vadd.f32 %v1407, %v1455
        %v1457 = vpop.f32.mrf.mxu0
        %v1458 = vadd.f32 %v1409, %v1457
        %1459 = vmatmul.bf16.gmra.mxu0 %v493
        %v1460 = vpop.f32.mrf.mxu0
        %v1461 = vadd.f32 %v1412, %v1460
        %v1462 = vpop.f32.mrf.mxu0
        %v1463 = vadd.f32 %v1414, %v1462
        %1464 = vmatmul.bf16.gmra.mxu0 %v501
        %v1465 = vpop.f32.mrf.mxu0
        %v1466 = vadd.f32 %v1417, %v1465
        %v1467 = vpop.f32.mrf.mxu0
        %v1468 = vadd.f32 %v1419, %v1467
        %1469 = vdwg.mxu0
        %1470 = vmatpush.bf16.msra.mxu0 %v1251
        %1471 = vmatpush.bf16.msra.mxu0 %v1250
        %1472 = vmatpush.bf16.msra.mxu0 %v1249
        %1473 = vmatpush.bf16.msra.mxu0 %v1248
        %1474 = vmatpush.bf16.msra.mxu0 %v1247
        %1475 = vmatpush.bf16.msra.mxu0 %v1246
        %1476 = vmatpush.bf16.msra.mxu0 %v1245
        %1477 = vmatpush.bf16.msra.mxu0 %v1244
        %1478 = vmatmul.bf16.gmra.mxu0 %v513
        %v1479 = vpop.f32.mrf.mxu0
        %v1480 = vadd.f32 %v1431, %v1479
        %v1481 = vpop.f32.mrf.mxu0
        %v1482 = vadd.f32 %v1433, %v1481
        %1483 = vmatmul.bf16.gmra.mxu0 %v515
        %v1484 = vpop.f32.mrf.mxu0
        %v1485 = vadd.f32 %v1436, %v1484
        %v1486 = vpop.f32.mrf.mxu0
        %v1487 = vadd.f32 %v1438, %v1486
        %1488 = vmatmul.bf16.gmra.mxu0 %v517
        %v1489 = vpop.f32.mrf.mxu0
        %v1490 = vadd.f32 %v1441, %v1489
        %v1491 = vpop.f32.mrf.mxu0
        %v1492 = vadd.f32 %v1443, %v1491
        %1493 = vmatmul.bf16.gmra.mxu0 %v519
        %v1494 = vpop.f32.mrf.mxu0
        %v1495 = vadd.f32 %v1446, %v1494
        %v1496 = vpop.f32.mrf.mxu0
        %v1497 = vadd.f32 %v1448, %v1496
        %1498 = vmatmul.bf16.gmra.mxu0 %v521
        %v1499 = vpop.f32.mrf.mxu0
        %v1500 = vadd.f32 %v1451, %v1499
        %v1501 = vpop.f32.mrf.mxu0
        %v1502 = vadd.f32 %v1453, %v1501
        %1503 = vmatmul.bf16.gmra.mxu0 %v523
        %v1504 = vpop.f32.mrf.mxu0
        %v1505 = vadd.f32 %v1456, %v1504
        %v1506 = vpop.f32.mrf.mxu0
        %v1507 = vadd.f32 %v1458, %v1506
        %1508 = vmatmul.bf16.gmra.mxu0 %v525
        %v1509 = vpop.f32.mrf.mxu0
        %v1510 = vadd.f32 %v1461, %v1509
        %v1511 = vpop.f32.mrf.mxu0
        %v1512 = vadd.f32 %v1463, %v1511
        %1513 = vmatmul.bf16.gmra.mxu0 %v527
        %v1514 = vpop.f32.mrf.mxu0
        %v1515 = vadd.f32 %v1466, %v1514
        %v1516 = vpop.f32.mrf.mxu0
        %v1517 = vadd.f32 %v1468, %v1516
        %1518 = vdwg.mxu0
        %1519 = vmatpush.bf16.msra.mxu0 %v1259
        %1520 = vmatpush.bf16.msra.mxu0 %v1258
        %1521 = vmatpush.bf16.msra.mxu0 %v1257
        %1522 = vmatpush.bf16.msra.mxu0 %v1256
        %1523 = vmatpush.bf16.msra.mxu0 %v1255
        %1524 = vmatpush.bf16.msra.mxu0 %v1254
        %1525 = vmatpush.bf16.msra.mxu0 %v1253
        %1526 = vmatpush.bf16.msra.mxu0 %v1252
        %1527 = vmatmul.bf16.gmra.mxu0 %v549
        %v1528 = vpop.f32.mrf.mxu0
        %v1529 = vadd.f32 %v1480, %v1528
        %v1530 = vpop.f32.mrf.mxu0
        %v1531 = vadd.f32 %v1482, %v1530
        %1532 = vmatmul.bf16.gmra.mxu0 %v551
        %v1533 = vpop.f32.mrf.mxu0
        %v1534 = vadd.f32 %v1485, %v1533
        %v1535 = vpop.f32.mrf.mxu0
        %v1536 = vadd.f32 %v1487, %v1535
        %1537 = vmatmul.bf16.gmra.mxu0 %v553
        %v1538 = vpop.f32.mrf.mxu0
        %v1539 = vadd.f32 %v1490, %v1538
        %v1540 = vpop.f32.mrf.mxu0
        %v1541 = vadd.f32 %v1492, %v1540
        %1542 = vmatmul.bf16.gmra.mxu0 %v555
        %v1543 = vpop.f32.mrf.mxu0
        %v1544 = vadd.f32 %v1495, %v1543
        %v1545 = vpop.f32.mrf.mxu0
        %v1546 = vadd.f32 %v1497, %v1545
        %1547 = vmatmul.bf16.gmra.mxu0 %v557
        %v1548 = vpop.f32.mrf.mxu0
        %v1549 = vadd.f32 %v1500, %v1548
        %v1550 = vpop.f32.mrf.mxu0
        %v1551 = vadd.f32 %v1502, %v1550
        %1552 = vmatmul.bf16.gmra.mxu0 %v559
        %v1553 = vpop.f32.mrf.mxu0
        %v1554 = vadd.f32 %v1505, %v1553
        %v1555 = vpop.f32.mrf.mxu0
        %v1556 = vadd.f32 %v1507, %v1555
        %1557 = vmatmul.bf16.gmra.mxu0 %v561
        %v1558 = vpop.f32.mrf.mxu0
        %v1559 = vadd.f32 %v1510, %v1558
        %v1560 = vpop.f32.mrf.mxu0
        %v1561 = vadd.f32 %v1512, %v1560
        %1562 = vmatmul.bf16.gmra.mxu0 %v563
        %v1563 = vpop.f32.mrf.mxu0
        %v1564 = vadd.f32 %v1515, %v1563
        %v1565 = vpop.f32.mrf.mxu0
        %v1566 = vadd.f32 %v1517, %v1565
        %1567 = vdwg.mxu0
        %1568 = vmatpush.bf16.msra.mxu0 %v1267
        %1569 = vmatpush.bf16.msra.mxu0 %v1266
        %1570 = vmatpush.bf16.msra.mxu0 %v1265
        %1571 = vmatpush.bf16.msra.mxu0 %v1264
        %1572 = vmatpush.bf16.msra.mxu0 %v1263
        %1573 = vmatpush.bf16.msra.mxu0 %v1262
        %1574 = vmatpush.bf16.msra.mxu0 %v1261
        %1575 = vmatpush.bf16.msra.mxu0 %v1260
        %1576 = vmatmul.bf16.gmra.mxu0 %v589
        %v1577 = vpop.f32.mrf.mxu0
        %v1578 = vadd.f32 %v1529, %v1577
        %v1579 = vpop.f32.mrf.mxu0
        %v1580 = vadd.f32 %v1531, %v1579
        %1581 = vmatmul.bf16.gmra.mxu0 %v598
        %v1582 = vpop.f32.mrf.mxu0
        %v1583 = vadd.f32 %v1534, %v1582
        %v1584 = vpop.f32.mrf.mxu0
        %v1585 = vadd.f32 %v1536, %v1584
        %1586 = vmatmul.bf16.gmra.mxu0 %v607
        %v1587 = vpop.f32.mrf.mxu0
        %v1588 = vadd.f32 %v1539, %v1587
        %v1589 = vpop.f32.mrf.mxu0
        %v1590 = vadd.f32 %v1541, %v1589
        %1591 = vmatmul.bf16.gmra.mxu0 %v616
        %v1592 = vpop.f32.mrf.mxu0
        %v1593 = vadd.f32 %v1544, %v1592
        %v1594 = vpop.f32.mrf.mxu0
        %v1595 = vadd.f32 %v1546, %v1594
        %1596 = vmatmul.bf16.gmra.mxu0 %v625
        %v1597 = vpop.f32.mrf.mxu0
        %v1598 = vadd.f32 %v1549, %v1597
        %v1599 = vpop.f32.mrf.mxu0
        %v1600 = vadd.f32 %v1551, %v1599
        %1601 = vmatmul.bf16.gmra.mxu0 %v634
        %v1602 = vpop.f32.mrf.mxu0
        %v1603 = vadd.f32 %v1554, %v1602
        %v1604 = vpop.f32.mrf.mxu0
        %v1605 = vadd.f32 %v1556, %v1604
        %1606 = vmatmul.bf16.gmra.mxu0 %v643
        %v1607 = vpop.f32.mrf.mxu0
        %v1608 = vadd.f32 %v1559, %v1607
        %v1609 = vpop.f32.mrf.mxu0
        %v1610 = vadd.f32 %v1561, %v1609
        %1611 = vmatmul.bf16.gmra.mxu0 %v652
        %v1612 = vpop.f32.mrf.mxu0
        %v1613 = vadd.f32 %v1564, %v1612
        %v1614 = vpop.f32.mrf.mxu0
        %v1615 = vadd.f32 %v1566, %v1614
        %1616 = vdwg.mxu0
        %1617 = vmatpush.bf16.msra.mxu0 %v1275
        %1618 = vmatpush.bf16.msra.mxu0 %v1274
        %1619 = vmatpush.bf16.msra.mxu0 %v1273
        %1620 = vmatpush.bf16.msra.mxu0 %v1272
        %1621 = vmatpush.bf16.msra.mxu0 %v1271
        %1622 = vmatpush.bf16.msra.mxu0 %v1270
        %1623 = vmatpush.bf16.msra.mxu0 %v1269
        %1624 = vmatpush.bf16.msra.mxu0 %v1268
        %1625 = vmatmul.bf16.gmra.mxu0 %v664
        %v1626 = vpop.f32.mrf.mxu0
        %v1627 = vadd.f32 %v1578, %v1626
        %v1628 = vpop.f32.mrf.mxu0
        %v1629 = vadd.f32 %v1580, %v1628
        %1630 = vmatmul.bf16.gmra.mxu0 %v666
        %v1631 = vpop.f32.mrf.mxu0
        %v1632 = vadd.f32 %v1583, %v1631
        %v1633 = vpop.f32.mrf.mxu0
        %v1634 = vadd.f32 %v1585, %v1633
        %1635 = vmatmul.bf16.gmra.mxu0 %v668
        %v1636 = vpop.f32.mrf.mxu0
        %v1637 = vadd.f32 %v1588, %v1636
        %v1638 = vpop.f32.mrf.mxu0
        %v1639 = vadd.f32 %v1590, %v1638
        %1640 = vmatmul.bf16.gmra.mxu0 %v670
        %v1641 = vpop.f32.mrf.mxu0
        %v1642 = vadd.f32 %v1593, %v1641
        %v1643 = vpop.f32.mrf.mxu0
        %v1644 = vadd.f32 %v1595, %v1643
        %1645 = vmatmul.bf16.gmra.mxu0 %v672
        %v1646 = vpop.f32.mrf.mxu0
        %v1647 = vadd.f32 %v1598, %v1646
        %v1648 = vpop.f32.mrf.mxu0
        %v1649 = vadd.f32 %v1600, %v1648
        %1650 = vmatmul.bf16.gmra.mxu0 %v674
        %v1651 = vpop.f32.mrf.mxu0
        %v1652 = vadd.f32 %v1603, %v1651
        %v1653 = vpop.f32.mrf.mxu0
        %v1654 = vadd.f32 %v1605, %v1653
        %1655 = vmatmul.bf16.gmra.mxu0 %v676
        %v1656 = vpop.f32.mrf.mxu0
        %v1657 = vadd.f32 %v1608, %v1656
        %v1658 = vpop.f32.mrf.mxu0
        %v1659 = vadd.f32 %v1610, %v1658
        %1660 = vmatmul.bf16.gmra.mxu0 %v678
        %v1661 = vpop.f32.mrf.mxu0
        %v1662 = vadd.f32 %v1613, %v1661
        %v1663 = vpop.f32.mrf.mxu0
        %v1664 = vadd.f32 %v1615, %v1663
        %1665 = vdwg.mxu0
        %1666 = vmatpush.bf16.msra.mxu0 %v1283
        %1667 = vmatpush.bf16.msra.mxu0 %v1282
        %1668 = vmatpush.bf16.msra.mxu0 %v1281
        %1669 = vmatpush.bf16.msra.mxu0 %v1280
        %1670 = vmatpush.bf16.msra.mxu0 %v1279
        %1671 = vmatpush.bf16.msra.mxu0 %v1278
        %1672 = vmatpush.bf16.msra.mxu0 %v1277
        %1673 = vmatpush.bf16.msra.mxu0 %v1276
        %1674 = vmatmul.bf16.gmra.mxu0 %v693
        %v1675 = vpop.f32.mrf.mxu0
        %v1676 = vadd.f32 %v1627, %v1675
        %v1677 = vpop.f32.mrf.mxu0
        %v1678 = vadd.f32 %v1629, %v1677
        %1679 = vmatmul.bf16.gmra.mxu0 %v695
        %v1680 = vpop.f32.mrf.mxu0
        %v1681 = vadd.f32 %v1632, %v1680
        %v1682 = vpop.f32.mrf.mxu0
        %v1683 = vadd.f32 %v1634, %v1682
        %1684 = vmatmul.bf16.gmra.mxu0 %v697
        %v1685 = vpop.f32.mrf.mxu0
        %v1686 = vadd.f32 %v1637, %v1685
        %v1687 = vpop.f32.mrf.mxu0
        %v1688 = vadd.f32 %v1639, %v1687
        %1689 = vmatmul.bf16.gmra.mxu0 %v699
        %v1690 = vpop.f32.mrf.mxu0
        %v1691 = vadd.f32 %v1642, %v1690
        %v1692 = vpop.f32.mrf.mxu0
        %v1693 = vadd.f32 %v1644, %v1692
        %1694 = vmatmul.bf16.gmra.mxu0 %v701
        %v1695 = vpop.f32.mrf.mxu0
        %v1696 = vadd.f32 %v1647, %v1695
        %v1697 = vpop.f32.mrf.mxu0
        %v1698 = vadd.f32 %v1649, %v1697
        %1699 = vmatmul.bf16.gmra.mxu0 %v703
        %v1700 = vpop.f32.mrf.mxu0
        %v1701 = vadd.f32 %v1652, %v1700
        %v1702 = vpop.f32.mrf.mxu0
        %v1703 = vadd.f32 %v1654, %v1702
        %1704 = vmatmul.bf16.gmra.mxu0 %v705
        %v1705 = vpop.f32.mrf.mxu0
        %v1706 = vadd.f32 %v1657, %v1705
        %v1707 = vpop.f32.mrf.mxu0
        %v1708 = vadd.f32 %v1659, %v1707
        %1709 = vmatmul.bf16.gmra.mxu0 %v707
        %v1710 = vpop.f32.mrf.mxu0
        %v1711 = vadd.f32 %v1662, %v1710
        %v1712 = vpop.f32.mrf.mxu0
        %v1713 = vadd.f32 %v1664, %v1712
        %1714 = vdwg.mxu0
        %1715 = vmatpush.bf16.msra.mxu0 %v1291
        %1716 = vmatpush.bf16.msra.mxu0 %v1290
        %1717 = vmatpush.bf16.msra.mxu0 %v1289
        %1718 = vmatpush.bf16.msra.mxu0 %v1288
        %1719 = vmatpush.bf16.msra.mxu0 %v1287
        %1720 = vmatpush.bf16.msra.mxu0 %v1286
        %1721 = vmatpush.bf16.msra.mxu0 %v1285
        %1722 = vmatpush.bf16.msra.mxu0 %v1284
        %1723 = vmatmul.bf16.gmra.mxu0 %v723
        %v1724 = vpop.f32.mrf.mxu0
        %v1725 = vadd.f32 %v1676, %v1724
        %v1726 = vpop.f32.mrf.mxu0
        %v1727 = vadd.f32 %v1678, %v1726
        %1728 = vmatmul.bf16.gmra.mxu0 %v727
        %v1729 = vpop.f32.mrf.mxu0
        %v1730 = vadd.f32 %v1681, %v1729
        %v1731 = vpop.f32.mrf.mxu0
        %v1732 = vadd.f32 %v1683, %v1731
        %1733 = vmatmul.bf16.gmra.mxu0 %v731
        %v1734 = vpop.f32.mrf.mxu0
        %v1735 = vadd.f32 %v1686, %v1734
        %v1736 = vpop.f32.mrf.mxu0
        %v1737 = vadd.f32 %v1688, %v1736
        %1738 = vmatmul.bf16.gmra.mxu0 %v735
        %v1739 = vpop.f32.mrf.mxu0
        %v1740 = vadd.f32 %v1691, %v1739
        %v1741 = vpop.f32.mrf.mxu0
        %v1742 = vadd.f32 %v1693, %v1741
        %1743 = vmatmul.bf16.gmra.mxu0 %v739
        %v1744 = vpop.f32.mrf.mxu0
        %v1745 = vadd.f32 %v1696, %v1744
        %v1746 = vpop.f32.mrf.mxu0
        %v1747 = vadd.f32 %v1698, %v1746
        %1748 = vmatmul.bf16.gmra.mxu0 %v743
        %v1749 = vpop.f32.mrf.mxu0
        %v1750 = vadd.f32 %v1701, %v1749
        %v1751 = vpop.f32.mrf.mxu0
        %v1752 = vadd.f32 %v1703, %v1751
        %1753 = vmatmul.bf16.gmra.mxu0 %v752
        %v1754 = vpop.f32.mrf.mxu0
        %v1755 = vadd.f32 %v1706, %v1754
        %v1756 = vpop.f32.mrf.mxu0
        %v1757 = vadd.f32 %v1708, %v1756
        %1758 = vmatmul.bf16.gmra.mxu0 %v761
        %v1759 = vpop.f32.mrf.mxu0
        %v1760 = vadd.f32 %v1711, %v1759
        %v1761 = vpop.f32.mrf.mxu0
        %v1762 = vadd.f32 %v1713, %v1761
        %1763 = vdwg.mxu0
        %1764 = vmatpush.bf16.msra.mxu0 %v1299
        %1765 = vmatpush.bf16.msra.mxu0 %v1298
        %1766 = vmatpush.bf16.msra.mxu0 %v1297
        %1767 = vmatpush.bf16.msra.mxu0 %v1296
        %1768 = vmatpush.bf16.msra.mxu0 %v1295
        %1769 = vmatpush.bf16.msra.mxu0 %v1294
        %1770 = vmatpush.bf16.msra.mxu0 %v1293
        %1771 = vmatpush.bf16.msra.mxu0 %v1292
        %1772 = vmatmul.bf16.gmra.mxu0 %v773
        %v1773 = vpop.f32.mrf.mxu0
        %v1774 = vadd.f32 %v1725, %v1773
        %v1775 = vpop.f32.mrf.mxu0
        %v1776 = vadd.f32 %v1727, %v1775
        %1777 = vmatmul.bf16.gmra.mxu0 %v775
        %v1778 = vpop.f32.mrf.mxu0
        %v1779 = vadd.f32 %v1730, %v1778
        %v1780 = vpop.f32.mrf.mxu0
        %v1781 = vadd.f32 %v1732, %v1780
        %1782 = vmatmul.bf16.gmra.mxu0 %v777
        %v1783 = vpop.f32.mrf.mxu0
        %v1784 = vadd.f32 %v1735, %v1783
        %v1785 = vpop.f32.mrf.mxu0
        %v1786 = vadd.f32 %v1737, %v1785
        %1787 = vmatmul.bf16.gmra.mxu0 %v779
        %v1788 = vpop.f32.mrf.mxu0
        %v1789 = vadd.f32 %v1740, %v1788
        %v1790 = vpop.f32.mrf.mxu0
        %v1791 = vadd.f32 %v1742, %v1790
        %1792 = vmatmul.bf16.gmra.mxu0 %v781
        %v1793 = vpop.f32.mrf.mxu0
        %v1794 = vadd.f32 %v1745, %v1793
        %v1795 = vpop.f32.mrf.mxu0
        %v1796 = vadd.f32 %v1747, %v1795
        %1797 = vmatmul.bf16.gmra.mxu0 %v783
        %v1798 = vpop.f32.mrf.mxu0
        %v1799 = vadd.f32 %v1750, %v1798
        %v1800 = vpop.f32.mrf.mxu0
        %v1801 = vadd.f32 %v1752, %v1800
        %1802 = vmatmul.bf16.gmra.mxu0 %v785
        %v1803 = vpop.f32.mrf.mxu0
        %v1804 = vadd.f32 %v1755, %v1803
        %v1805 = vpop.f32.mrf.mxu0
        %v1806 = vadd.f32 %v1757, %v1805
        %1807 = vmatmul.bf16.gmra.mxu0 %v787
        %v1808 = vpop.f32.mrf.mxu0
        %v1809 = vadd.f32 %v1760, %v1808
        %v1810 = vpop.f32.mrf.mxu0
        %v1811 = vadd.f32 %v1762, %v1810
        %1812 = vdwg.mxu0
        %v1813 = vld [vmem:[%s3] sm:$0x1]
        %v1815 = vperm.slane %v1813, 0
        %v1817 = vmul.f32 %v1774, %v1815
        %v1818 = vmul.f32 %v1776, %v1815
        %v1819 = vmul.f32 %v1779, %v1815
        %v1820 = vmul.f32 %v1781, %v1815
        %v1821 = vmul.f32 %v1784, %v1815
        %v1822 = vmul.f32 %v1786, %v1815
        %v1823 = vmul.f32 %v1789, %v1815
        %v1824 = vmul.f32 %v1791, %v1815
        %v1825 = vmul.f32 %v1794, %v1815
        %v1826 = vmul.f32 %v1796, %v1815
        %v1827 = vmul.f32 %v1799, %v1815
        %v1828 = vmul.f32 %v1801, %v1815
        %v1829 = vmul.f32 %v1804, %v1815
        %v1830 = vmul.f32 %v1806, %v1815
        %v1831 = vmul.f32 %v1809, %v1815
        %v1832 = vmul.f32 %v1811, %v1815
        %v1833 = vld [vmem:[%s4] sm:$0x1]
        %v1835 = vperm.slane %v1833, 0
        %v1837 = vadd.f32 %v1817, %v1835
        %v1838 = vadd.f32 %v1818, %v1835
        %v1839 = vadd.f32 %v1819, %v1835
        %v1840 = vadd.f32 %v1820, %v1835
        %v1841 = vadd.f32 %v1821, %v1835
        %v1842 = vadd.f32 %v1822, %v1835
        %v1843 = vadd.f32 %v1823, %v1835
        %v1844 = vadd.f32 %v1824, %v1835
        %v1845 = vadd.f32 %v1825, %v1835
        %v1846 = vadd.f32 %v1826, %v1835
        %v1847 = vadd.f32 %v1827, %v1835
        %v1848 = vadd.f32 %v1828, %v1835
        %v1849 = vadd.f32 %v1829, %v1835
        %v1850 = vadd.f32 %v1830, %v1835
        %v1851 = vadd.f32 %v1831, %v1835
        %v1852 = vadd.f32 %v1832, %v1835
        %v1853 = vmax.f32 %v1837, 0.0
        %v1854 = vmax.f32 %v1838, 0.0
        %v1855 = vmax.f32 %v1839, 0.0
        %v1856 = vmax.f32 %v1840, 0.0
        %v1857 = vmax.f32 %v1841, 0.0
        %v1858 = vmax.f32 %v1842, 0.0
        %v1859 = vmax.f32 %v1843, 0.0
        %v1860 = vmax.f32 %v1844, 0.0
        %v1861 = vmax.f32 %v1845, 0.0
        %v1862 = vmax.f32 %v1846, 0.0
        %v1863 = vmax.f32 %v1847, 0.0
        %v1864 = vmax.f32 %v1848, 0.0
        %v1865 = vmax.f32 %v1849, 0.0
        %v1866 = vmax.f32 %v1850, 0.0
        %v1867 = vmax.f32 %v1851, 0.0
        %v1868 = vmax.f32 %v1852, 0.0
        %v1869 = vpack.c.bf16 %v1853, %v1853
        %v1870 = vpack.c.bf16 %v1854, %v1854
        %v1871 = vpack.c.bf16 %v1855, %v1855
        %v1872 = vpack.c.bf16 %v1856, %v1856
        %v1873 = vpack.c.bf16 %v1857, %v1857
        %v1874 = vpack.c.bf16 %v1858, %v1858
        %v1875 = vpack.c.bf16 %v1859, %v1859
        %v1876 = vpack.c.bf16 %v1860, %v1860
        %v1877 = vpack.c.bf16 %v1861, %v1861
        %v1878 = vpack.c.bf16 %v1862, %v1862
        %v1879 = vpack.c.bf16 %v1863, %v1863
        %v1880 = vpack.c.bf16 %v1864, %v1864
        %v1881 = vpack.c.bf16 %v1865, %v1865
        %v1882 = vpack.c.bf16 %v1866, %v1866
        %v1883 = vpack.c.bf16 %v1867, %v1867
        %v1884 = vpack.c.bf16 %v1868, %v1868
        %1885 = vst [vmem:[%s315] sm:$0xf] %v1869
        %1886 = vst [vmem:[%s315 + $0x4] sm:$0xf] %v1870
        %1887 = vst [vmem:[%s315 + $0x8] sm:$0xf] %v1871
        %1888 = vst [vmem:[%s315 + $0xc] sm:$0xf] %v1872
        %1889 = vst [vmem:[%s315 + $0x10] sm:$0xf] %v1873
        %1890 = vst [vmem:[%s315 + $0x14] sm:$0xf] %v1874
        %1891 = vst [vmem:[%s315 + $0x18] sm:$0xf] %v1875
        %1892 = vst [vmem:[%s315 + $0x1c] sm:$0xf] %v1876
        %1893 = vst [vmem:[%s315 + $0x20] sm:$0xf] %v1877
        %1894 = vst [vmem:[%s315 + $0x24] sm:$0xf] %v1878
        %1895 = vst [vmem:[%s315 + $0x28] sm:$0xf] %v1879
        %1896 = vst [vmem:[%s315 + $0x2c] sm:$0xf] %v1880
        %1897 = vst [vmem:[%s315 + $0x30] sm:$0xf] %v1881
        %1898 = vst [vmem:[%s315 + $0x34] sm:$0xf] %v1882
        %1899 = vst [vmem:[%s315 + $0x38] sm:$0xf] %v1883
        %1900 = vst [vmem:[%s315 + $0x3c] sm:$0xf] %v1884
        %s1901 = sand.u32 %s152, 1
        %s1902 = scalar_lea.sflag [#allocation4], %s1901
        %s1903 = sand.u32 %s152, 1
        %s1904 = smul.addr %s1903, 64
        %s1905 = scalar_lea.vmem [#allocation8], %s1904
        // Predicated region
        $region53: #{tpu_custom_call.1} parent=39 // pred_check
          %p1906 = pneg %p162
        $region54: #{tpu_custom_call.1} parent=39 // pred_check_branch
          %1908 = sbr.rel (%p1906) target = $region56
        $region55: #{tpu_custom_call.1} parent=39 // pred_region
          %s1909 = smul.u32 16, %s25
          %1911 = vsyncadd %s1902, 0
          %s1912 = smul.addr %s1909, 4
          %s1913 = scalar_lea.hbm %s5, %s1912
          %s1914 = sshll.u32 %s1905, 4
          %s1915 = int_to_ptr.vmem [resolvable:$true] %s1914
          %s1916 = sshll.u32 %s1913, 4
          %s1917 = int_to_ptr.hbm [resolvable:$true] %s1916
          %1922 = dma.vmem_to_hbm [thread:$0]  %s1915, 1024, %s1917, %s1902, 64, 64, 4
        $region56: #{tpu_custom_call.1} parent=39 // pred_fallthru
          _
      $region40: #{tpu_custom_call.1} parent=5 // pred_fallthru
        _
      %p1923 = scmp.le.s32.totalorder 2, %s20
      // Predicated region
      $region57: #{tpu_custom_call.1} parent=5 // pred_check
        %p1924 = pneg %p1923
      $region58: #{tpu_custom_call.1} parent=5 // pred_check_branch
        %1926 = sbr.rel (%p1924) target = $region60
      $region59: #{tpu_custom_call.1} parent=5 // pred_region
        %s1927 = ssub.s32 %s20, 2
        // Predicated region
        $region61: #{tpu_custom_call.1} parent=59 // pred_check
          %p1928 = pneg %p168
        $region62: #{tpu_custom_call.1} parent=59 // pred_check_branch
          %1930 = sbr.rel (%p1928) target = $region64
        $region63: #{tpu_custom_call.1} parent=59 // pred_region
          %s1931 = sand.u32 %s153, 1
          %s1932 = scalar_lea.sflag [#allocation4], %s1931
          %s1933 = sand.u32 %s153, 1
          %s1934 = smul.addr %s1933, 64
          %s1935 = scalar_lea.vmem [#allocation8], %s1934
          %1937 = dma.done %s1932, 1024
        $region64: #{tpu_custom_call.1} parent=59 // pred_fallthru
          _
      $region60: #{tpu_custom_call.1} parent=5 // pred_fallthru
        _
    $region6: #{tpu_custom_call.1} parent=1 // loop_footer
      %s24 = sadd.s32 1, %s20
    $region7: #{tpu_custom_call.1} parent=1 // loop_footer_branch
      %19 = sbr.rel target = $region3
    $region8: #{tpu_custom_call.1} parent=1 // loop_exit
      _
    %1938 = vsyncpa [#allocation3], 1
    %s1939 = scalar_lea.sflag [#allocation3], 1
    %1940 = vsyncpa %s1939, 1
    %1941 = vsyncpa [#allocation6], 1
    %s1942 = scalar_lea.sflag [#allocation6], 1
    %1943 = vsyncpa %s1942, 1
    %1944 = vsyncpa [#allocation4], 1
    %s1945 = scalar_lea.sflag [#allocation4], 1
    %1946 = vsyncpa %s1945, 1

</llo_original>
